<compile_context>
chip_gen: v7x
topology: tpu7x:2x2x1
jax: 0.10.0
libtpu: 0.0.40
codegen_flags: <defaults>
</compile_context>

<pallas_src>
import functools

import jax
import jax.numpy as jnp
from jax.experimental import pallas as pl
from jax.experimental.pallas import tpu as pltpu


# ----------------------------------------------------------------------------
# Pallas kernel: full MyGAT forward for TB batch elements (all heads fused)
# ----------------------------------------------------------------------------
def _mygat_kernel(x_ref, ma_ref, w_ref, a_ref, sel_ref, o_ref,
                  *, alpha, nheads, mxu_dtype):
    TB, S, Fin = x_ref.shape
    H = nheads

    def mxu(v):
        # Cast MXU operands only; accumulation and all elementwise math stay f32
        # (v5e has no bf16 VPU/EUP path).
        return v if mxu_dtype is None else v.astype(mxu_dtype)

    x = x_ref[...].reshape(TB * S, Fin)          # (TB*S, F)  fill the MXU M dim
    ma = ma_ref[...]                             # (TB, S, 2) merged [mask | adj]
    mask = ma[:, :, 0:1]                         # (TB, S, 1)
    adjv = ma[:, :, 1:2]                         # (TB, S, 1)
    W = w_ref[...]                               # (F, F)   per-head W stacked on lanes
    A = a_ref[...]                               # (F, 2H)  [:, :H]=a1 blocks, [:, H:]=a2
    sel = sel_ref[...]                           # (H, F)   head -> feature-lane selector

    # Per-head projections and `a` reductions, all heads at once, on the MXU.
    h = jnp.dot(mxu(x), mxu(W), preferred_element_type=jnp.float32)    # (TB*S, F)
    g = jnp.dot(mxu(h), mxu(A), preferred_element_type=jnp.float32)    # (TB*S, 2H)
    g = g.reshape(TB, S, 2 * H)
    g1 = g[:, :, :H]                             # a1_h . h[b, s, head-h slice]
    g2 = g[:, :, H:]                             # a2_h . h[b, s, head-h slice]

    # masked-mean "query" logit per (batch, head): f1 = a1_h . h_star
    # TODO(synk): no guard for an all-zero mask row (matches PyTorch, which
    # also produces NaN there).
    msum = jnp.sum(mask, axis=1, keepdims=True)                        # (TB, 1, 1)
    f1 = jnp.sum(mask * g1, axis=1, keepdims=True) / msum              # (TB, 1, H)

    e = f1 + g2                                                        # (TB, S, H)
    e = jnp.where(e > 0, e, alpha * e)                                 # LeakyReLU
    e = jnp.where(adjv > 0, e, jnp.float32(-9e15))                     # adjacency mask

    # softmax over the sequence axis — exact divide (the approx reciprocal was
    # the source of the previous accuracy failure).
    e = e - jnp.max(e, axis=1, keepdims=True)
    p = jnp.exp(e)
    att = p / jnp.sum(p, axis=1, keepdims=True)                        # (TB, S, H)

    # attention apply: S-contraction on the MXU, then a trivial H-row reduce
    # through the head->lane selector (no (S,F) VPU mult / S-deep XLU reduce).
    h3 = h.reshape(TB, S, Fin)
    P = jnp.einsum("bsh,bsf->bhf", mxu(att), mxu(h3),
                   preferred_element_type=jnp.float32)                 # (TB, H, F)
    hp = jnp.sum(P * sel[None, :, :], axis=1)                          # (TB, F)

    # ELU (concat=True); clamp exp arg so the discarded branch stays finite.
    hp = jnp.where(hp > 0, hp, jnp.exp(jnp.minimum(hp, 0.0)) - 1.0)

    o_ref[0] = hp.astype(o_ref.dtype)            # lane/sublane-dense (TB, F) slab


# ----------------------------------------------------------------------------
# Host-side parameter packing: stack per-head (W, a) into lane-dense operands
# ----------------------------------------------------------------------------
def pack_gat_params(head_params, nheads):
    W_all = jnp.concatenate([p["W"] for p in head_params], axis=1)  # (F, F)
    Fin = W_all.shape[0]
    D = Fin // nheads
    A = jnp.zeros((Fin, 2 * nheads), jnp.float32)
    sel = jnp.zeros((nheads, Fin), jnp.float32)
    for i, p in enumerate(head_params):
        a = p["a"][:, 0]
        A = A.at[i * D:(i + 1) * D, i].set(a[:D])              # a1_i block
        A = A.at[i * D:(i + 1) * D, nheads + i].set(a[D:])     # a2_i block
        sel = sel.at[i, i * D:(i + 1) * D].set(1.0)
    # TODO(synk): for large Fin, store W_all/A in bf16 (halves HBM traffic / VMEM)
    # and zero-pad Fin toward 128/256 multiples for MXU/lane efficiency.
    return W_all, A, sel


def _pick_batch_tile(B, S, Fin):
    """Largest batch tile whose x-block fits a modest VMEM budget; prefer >=2
    grid steps (v7x megacore) once a half-batch step still carries real work."""
    per_elem = S * Fin * 4                      # f32 bytes of x per batch element
    budget = 4 << 20                            # ~4 MiB of x per grid step
    tb = 1
    for d in range(B, 0, -1):
        if B % d == 0 and d * per_elem <= budget:
            tb = d
            break
    if tb == B and B % 2 == 0 and (B // 2) * per_elem >= (64 << 10):
        tb = B // 2                             # expose a parallel axis for v7x
    return tb


def mygat_forward(x, mask_index, adj, W_all, A, sel, *, alpha,
                  batch_tile=None, mxu_dtype=None):
    """MyGAT forward (single=True, eval mode). Returns (B, 1, input_dim)."""
    # TODO(synk): F.dropout layers omitted (training=False semantics -> identity).
    B, S, Fin = x.shape
    H = sel.shape[0]
    tb = batch_tile if batch_tile is not None else _pick_batch_tile(B, S, Fin)
    assert B % tb == 0, "batch_tile must divide batch"
    nt = B // tb

    # mask & adj merged into one (B, S, 2) stream (one DMA per grid step).
    ma = jnp.stack([mask_index.astype(jnp.float32),
                    adj.astype(jnp.float32)], axis=-1)

    kernel = functools.partial(_mygat_kernel, alpha=float(alpha), nheads=H,
                               mxu_dtype=mxu_dtype)
    out = pl.pallas_call(
        kernel,
        out_shape=jax.ShapeDtypeStruct((nt, tb, Fin), jnp.float32),
        grid=(nt,),
        in_specs=[
            pl.BlockSpec((tb, S, Fin), lambda b: (b, 0, 0)),   # x
            pl.BlockSpec((tb, S, 2), lambda b: (b, 0, 0)),     # [mask | adj]
            pl.BlockSpec((Fin, Fin), lambda b: (0, 0)),        # W_all (shared)
            pl.BlockSpec((Fin, 2 * H), lambda b: (0, 0)),      # A      (shared)
            pl.BlockSpec((H, Fin), lambda b: (0, 0)),          # sel    (shared)
        ],
        out_specs=pl.BlockSpec((1, tb, Fin), lambda b: (b, 0, 0)),
        compiler_params=pltpu.CompilerParams(
            dimension_semantics=("parallel",),       # v7x: shard batch tiles over 2 TCs
            vmem_limit_bytes=32 * 1024 * 1024,       # explicit for v5e/v7x scoped defaults
        ),
        # TODO(synk): for large Fin add an "arbitrary" Fin-tiling grid axis and
        # single-buffer the shared W_all/A/sel specs (pl.Buffered(1)) for v7x VMEM.
    )(x, ma, W_all, A, sel)
    return out.reshape(B, Fin)[:, None, :]


# ----------------------------------------------------------------------------
# Parameter init (Xavier uniform, gain = 1.414), deterministic
# ----------------------------------------------------------------------------
def xavier_uniform(key, shape, gain=1.414):
    fan_in, fan_out = shape[0], shape[1]
    std = gain * (2.0 / (fan_in + fan_out)) ** 0.5
    bound = (3.0 ** 0.5) * std
    return jax.random.uniform(key, shape, jnp.float32, -bound, bound)


# ----------------------------------------------------------------------------
# Pure-JAX reference (faithful port of the PyTorch module, eval mode)
# ----------------------------------------------------------------------------
def _ref_head(x, mask_index, adj, W, a, alpha):
    h = x @ W                                               # (B, S, D)
    D = W.shape[1]
    m = jnp.broadcast_to(mask_index[:, :, None].astype(h.dtype), h.shape)
    h_star = (h * m).sum(axis=1) / m.sum(axis=1)            # (B, D)
    e = h_star @ a[:D, 0]                                   # (B,)
    e = e[:, None] + h @ a[D:, 0]                           # (B, S)
    e = jnp.where(e > 0, e, alpha * e)                      # LeakyReLU
    e = e[:, None, :]                                       # (B, 1, S)
    att = jnp.where(adj[:, None, :] > 0, e, -9e15)
    att = jax.nn.softmax(att, axis=2)
    h_prime = jnp.matmul(att, h)                            # (B, 1, D)
    return jax.nn.elu(h_prime)                              # concat=True


def mygat_reference(x, mask_index, adj, head_params, alpha):
    outs = [_ref_head(x, mask_index, adj, p["W"], p["a"], alpha)
            for p in head_params]
    return jnp.concatenate(outs, axis=2)                    # (B, 1, input_dim)


# ----------------------------------------------------------------------------
if __name__ == "__main__":
    # Keep the pure-JAX reference matmuls at full f32 precision on TPU so the
    # parity check is apples-to-apples with the f32 Pallas path.
    jax.config.update("jax_default_matmul_precision", "highest")

    B, S = 2, 8          # batch, seq_len
    input_dim = 32
    nheads = 4
    alpha = 0.2
    D = input_dim // nheads

    key = jax.random.PRNGKey(0)
    key, kx, kmask, kadj, kparam = jax.random.split(key, 5)

    x = jax.random.normal(kx, (B, S, input_dim), jnp.float32)
    mask_index = (jax.random.uniform(kmask, (B, S)) < 0.7).astype(jnp.float32)
    mask_index = mask_index.at[:, 0].set(1.0)   # guarantee >= 1 valid position
    adj = (jax.random.uniform(kadj, (B, S)) < 0.6).astype(jnp.float32)
    adj = adj.at[:, 0].set(1.0)                 # guarantee >= 1 attended position

    head_params = []
    for _ in range(nheads):
        kparam, kw, ka = jax.random.split(kparam, 3)
        head_params.append({
            "W": xavier_uniform(kw, (input_dim, D)),
            "a": xavier_uniform(ka, (2 * D, 1)),
        })

    W_all, A, sel = pack_gat_params(head_params, nheads)

    # Exact (f32 MXU) path: strict parity check against the reference.
    out = mygat_forward(x, mask_index, adj, W_all, A, sel, alpha=alpha)
    out = jax.block_until_ready(out)
    ref = mygat_reference(x, mask_index, adj, head_params, alpha)
    assert out.shape == (B, 1, input_dim)
    assert jnp.allclose(out, ref, atol=1e-3, rtol=1e-3), "mismatch vs reference"

    # bf16-MXU path (perf-review item): bf16 operands, f32 accumulation and f32
    # elementwise math.  Checked for shape/finiteness (bf16 logits perturb the
    # softmax weights, so no tight numeric assert on this variant).
    out_bf16 = mygat_forward(x, mask_index, adj, W_all, A, sel, alpha=alpha,
                             mxu_dtype=jnp.bfloat16)
    out_bf16 = jax.block_until_ready(out_bf16)
    assert out_bf16.shape == (B, 1, input_dim)
    assert bool(jnp.all(jnp.isfinite(out_bf16)))

    print("KERNEL_OK")
</pallas_src>

<mosaic_0001>
module attributes {stable_mosaic.version = 11 : i64} {
  func.func @_mygat_kernel(%arg0: i32, %arg1: memref<2x8x32xf32, #tpu.memory_space<vmem>>, %arg2: memref<2x8x2xf32, #tpu.memory_space<vmem>>, %arg3: memref<32x32xf32, #tpu.memory_space<vmem>>, %arg4: memref<32x8xf32, #tpu.memory_space<vmem>>, %arg5: memref<4x32xf32, #tpu.memory_space<vmem>>, %arg6: memref<1x2x32xf32, #tpu.memory_space<vmem>>) attributes {dimension_semantics = [#tpu.dimension_semantics<parallel>], iteration_bounds = array<i64: 1>, scalar_prefetch = 0 : i64, scratch_operands = 0 : i64, tpu.core_type = #tpu.core_type<tc>, window_params = [{transform_indices = @transform_0, window_bounds = array<i64: 2, 8, 32>}, {transform_indices = @transform_1, window_bounds = array<i64: 2, 8, 2>}, {pipeline_mode = #tpu.pipeline_mode<synchronous>, transform_indices = @transform_2, window_bounds = array<i64: 32, 32>}, {pipeline_mode = #tpu.pipeline_mode<synchronous>, transform_indices = @transform_3, window_bounds = array<i64: 32, 8>}, {pipeline_mode = #tpu.pipeline_mode<synchronous>, transform_indices = @transform_4, window_bounds = array<i64: 4, 32>}, {transform_indices = @transform_5, window_bounds = array<i64: 1, 2, 32>}]} {
    %c0 = arith.constant 0 : index
    %c0_0 = arith.constant 0 : index
    %c0_1 = arith.constant 0 : index
    %0 = vector.load %arg1[%c0, %c0_0, %c0_1] : memref<2x8x32xf32, #tpu.memory_space<vmem>>, vector<2x8x32xf32>
    %1 = vector.shape_cast %0 : vector<2x8x32xf32> to vector<16x32xf32>
    %c0_2 = arith.constant 0 : index
    %c0_3 = arith.constant 0 : index
    %c0_4 = arith.constant 0 : index
    %2 = vector.load %arg2[%c0_2, %c0_3, %c0_4] : memref<2x8x2xf32, #tpu.memory_space<vmem>>, vector<2x8x2xf32>
    %3 = vector.extract_strided_slice %2 {offsets = [0, 0, 0], sizes = [2, 8, 1], strides = [1, 1, 1]} : vector<2x8x2xf32> to vector<2x8x1xf32>
    %4 = vector.extract_strided_slice %2 {offsets = [0, 0, 1], sizes = [2, 8, 1], strides = [1, 1, 1]} : vector<2x8x2xf32> to vector<2x8x1xf32>
    %c0_5 = arith.constant 0 : index
    %c0_6 = arith.constant 0 : index
    %5 = vector.load %arg3[%c0_5, %c0_6] : memref<32x32xf32, #tpu.memory_space<vmem>>, vector<32x32xf32>
    %c0_7 = arith.constant 0 : index
    %c0_8 = arith.constant 0 : index
    %6 = vector.load %arg4[%c0_7, %c0_8] : memref<32x8xf32, #tpu.memory_space<vmem>>, vector<32x8xf32>
    %c0_9 = arith.constant 0 : index
    %c0_10 = arith.constant 0 : index
    %7 = vector.load %arg5[%c0_9, %c0_10] : memref<4x32xf32, #tpu.memory_space<vmem>>, vector<4x32xf32>
    %cst = arith.constant dense<0.000000e+00> : vector<16x32xf32>
    %8 = tpu.matmul %1, %5, %cst {dimension_numbers = #tpu.dot_dimension_numbers<[1], [0], [0], [1], [0, 0, 1, 1], [], []>, precision = #tpu.contract_precision<fp32>} : vector<16x32xf32>, vector<32x32xf32>, vector<16x32xf32> -> vector<16x32xf32>
    %cst_11 = arith.constant dense<0.000000e+00> : vector<16x8xf32>
    %9 = tpu.matmul %8, %6, %cst_11 {dimension_numbers = #tpu.dot_dimension_numbers<[1], [0], [0], [1], [0, 0, 1, 1], [], []>, precision = #tpu.contract_precision<fp32>} : vector<16x32xf32>, vector<32x8xf32>, vector<16x8xf32> -> vector<16x8xf32>
    %10 = vector.shape_cast %9 : vector<16x8xf32> to vector<2x8x8xf32>
    %11 = vector.extract_strided_slice %10 {offsets = [0, 0, 0], sizes = [2, 8, 4], strides = [1, 1, 1]} : vector<2x8x8xf32> to vector<2x8x4xf32>
    %12 = vector.extract_strided_slice %10 {offsets = [0, 0, 4], sizes = [2, 8, 4], strides = [1, 1, 1]} : vector<2x8x8xf32> to vector<2x8x4xf32>
    %cst_12 = arith.constant dense<0.000000e+00> : vector<2x1xf32>
    %13 = vector.multi_reduction <add>, %3, %cst_12 [1] : vector<2x8x1xf32> to vector<2x1xf32>
    %14 = vector.shape_cast %13 : vector<2x1xf32> to vector<2x1x1xf32>
    %15 = vector.broadcast %3 : vector<2x8x1xf32> to vector<2x8x4xf32>
    %16 = arith.mulf %15, %11 : vector<2x8x4xf32>
    %cst_13 = arith.constant dense<0.000000e+00> : vector<2x4xf32>
    %17 = vector.multi_reduction <add>, %16, %cst_13 [1] : vector<2x8x4xf32> to vector<2x4xf32>
    %18 = vector.shape_cast %17 : vector<2x4xf32> to vector<2x1x4xf32>
    %19 = vector.broadcast %14 : vector<2x1x1xf32> to vector<2x1x4xf32>
    %20 = arith.divf %18, %19 : vector<2x1x4xf32>
    %21 = vector.broadcast %20 : vector<2x1x4xf32> to vector<2x8x4xf32>
    %22 = arith.addf %21, %12 : vector<2x8x4xf32>
    %cst_14 = arith.constant 0.000000e+00 : f32
    %23 = vector.broadcast %cst_14 : f32 to vector<2x8x4xf32>
    %24 = arith.cmpf ogt, %22, %23 : vector<2x8x4xf32>
    %cst_15 = arith.constant 2.000000e-01 : f32
    %25 = vector.broadcast %cst_15 : f32 to vector<2x8x4xf32>
    %26 = arith.mulf %25, %22 : vector<2x8x4xf32>
    %27 = arith.select %24, %22, %26 : vector<2x8x4xi1>, vector<2x8x4xf32>
    %cst_16 = arith.constant 0.000000e+00 : f32
    %28 = vector.broadcast %cst_16 : f32 to vector<2x8x1xf32>
    %29 = arith.cmpf ogt, %4, %28 : vector<2x8x1xf32>
    %cst_17 = arith.constant -9.000000e+15 : f32
    %30 = vector.shape_cast %29 : vector<2x8x1xi1> to vector<2x8x1xi1>
    %31 = vector.broadcast %30 : vector<2x8x1xi1> to vector<2x8x4xi1>
    %32 = vector.broadcast %cst_17 : f32 to vector<2x8x4xf32>
    %33 = arith.select %31, %27, %32 : vector<2x8x4xi1>, vector<2x8x4xf32>
    %cst_18 = arith.constant dense<0xFF800000> : vector<2x4xf32>
    %34 = vector.multi_reduction <maximumf>, %33, %cst_18 [1] : vector<2x8x4xf32> to vector<2x4xf32>
    %35 = vector.shape_cast %34 : vector<2x4xf32> to vector<2x1x4xf32>
    %36 = vector.broadcast %35 : vector<2x1x4xf32> to vector<2x8x4xf32>
    %37 = arith.subf %33, %36 : vector<2x8x4xf32>
    %38 = math.exp %37 : vector<2x8x4xf32>
    %cst_19 = arith.constant dense<0.000000e+00> : vector<2x4xf32>
    %39 = vector.multi_reduction <add>, %38, %cst_19 [1] : vector<2x8x4xf32> to vector<2x4xf32>
    %40 = vector.shape_cast %39 : vector<2x4xf32> to vector<2x1x4xf32>
    %41 = vector.broadcast %40 : vector<2x1x4xf32> to vector<2x8x4xf32>
    %42 = arith.divf %38, %41 : vector<2x8x4xf32>
    %43 = vector.shape_cast %8 : vector<16x32xf32> to vector<2x8x32xf32>
    "tpu.trace_start"() <{level = 10 : i32, message = "bsh,bsf->bhf"}> : () -> ()
    %cst_20 = arith.constant dense<0.000000e+00> : vector<2x4x32xf32>
    %44 = tpu.matmul %42, %43, %cst_20 {dimension_numbers = #tpu.dot_dimension_numbers<[1], [1], [2], [2], [0, 0, 0, 2, 1, 2], [0], [0]>, precision = #tpu.contract_precision<fp32>} : vector<2x8x4xf32>, vector<2x8x32xf32>, vector<2x4x32xf32> -> vector<2x4x32xf32>
    "tpu.trace_stop"() : () -> ()
    %45 = vector.shape_cast %7 : vector<4x32xf32> to vector<1x4x32xf32>
    %46 = vector.broadcast %45 : vector<1x4x32xf32> to vector<2x4x32xf32>
    %47 = arith.mulf %44, %46 : vector<2x4x32xf32>
    %cst_21 = arith.constant dense<0.000000e+00> : vector<2x32xf32>
    %48 = vector.multi_reduction <add>, %47, %cst_21 [1] : vector<2x4x32xf32> to vector<2x32xf32>
    %cst_22 = arith.constant 0.000000e+00 : f32
    %49 = vector.broadcast %cst_22 : f32 to vector<2x32xf32>
    %50 = arith.cmpf ogt, %48, %49 : vector<2x32xf32>
    %cst_23 = arith.constant 0.000000e+00 : f32
    %51 = vector.broadcast %cst_23 : f32 to vector<2x32xf32>
    %52 = arith.minimumf %48, %51 : vector<2x32xf32>
    %53 = math.exp %52 : vector<2x32xf32>
    %cst_24 = arith.constant 1.000000e+00 : f32
    %54 = vector.broadcast %cst_24 : f32 to vector<2x32xf32>
    %55 = arith.subf %53, %54 : vector<2x32xf32>
    %56 = arith.select %50, %48, %55 : vector<2x32xi1>, vector<2x32xf32>
    %c0_25 = arith.constant 0 : index
    %c0_26 = arith.constant 0 : index
    %c0_27 = arith.constant 0 : index
    %57 = vector.load %arg6[%c0_25, %c0_26, %c0_27] : memref<1x2x32xf32, #tpu.memory_space<vmem>>, vector<1x2x32xf32>
    %58 = vector.shape_cast %57 : vector<1x2x32xf32> to vector<2x32xf32>
    %59 = vector.shape_cast %56 : vector<2x32xf32> to vector<1x2x32xf32>
    tpu.vector_store %arg6[%c0_25, %c0_26, %c0_27], %59 {strides = array<i32>} : memref<1x2x32xf32, #tpu.memory_space<vmem>>, vector<1x2x32xf32>,
    return
  }
  func.func @transform_0(%arg0: i32) -> (i32, i32, i32) {
    %c0_i32 = arith.constant 0 : i32
    %c0_i32_0 = arith.constant 0 : i32
    %c0_i32_1 = arith.constant 0 : i32
    return %arg0, %c0_i32, %c0_i32_0 : i32, i32, i32
  }
  func.func @transform_1(%arg0: i32) -> (i32, i32, i32) {
    %c0_i32 = arith.constant 0 : i32
    %c0_i32_0 = arith.constant 0 : i32
    %c0_i32_1 = arith.constant 0 : i32
    return %arg0, %c0_i32, %c0_i32_0 : i32, i32, i32
  }
  func.func @transform_2(%arg0: i32) -> (i32, i32) {
    %c0_i32 = arith.constant 0 : i32
    %c0_i32_0 = arith.constant 0 : i32
    %c0_i32_1 = arith.constant 0 : i32
    return %c0_i32, %c0_i32_0 : i32, i32
  }
  func.func @transform_3(%arg0: i32) -> (i32, i32) {
    %c0_i32 = arith.constant 0 : i32
    %c0_i32_0 = arith.constant 0 : i32
    %c0_i32_1 = arith.constant 0 : i32
    return %c0_i32, %c0_i32_0 : i32, i32
  }
  func.func @transform_4(%arg0: i32) -> (i32, i32) {
    %c0_i32 = arith.constant 0 : i32
    %c0_i32_0 = arith.constant 0 : i32
    %c0_i32_1 = arith.constant 0 : i32
    return %c0_i32, %c0_i32_0 : i32, i32
  }
  func.func @transform_5(%arg0: i32) -> (i32, i32, i32) {
    %c0_i32 = arith.constant 0 : i32
    %c0_i32_0 = arith.constant 0 : i32
    %c0_i32_1 = arith.constant 0 : i32
    return %arg0, %c0_i32, %c0_i32_0 : i32, i32, i32
  }
}

</mosaic_0001>

<llo_original>
// kernel: tpu_custom_call.1
$region0: #{tpu_custom_call.1}
  #allocation0 [shape = 'u32[]', space=smem, size = 0x4, offset = 0x4, fixed_abs, tag = 'smem constant byte address 0x4 - core index']
  #allocation1 [shape = 'u32[144,128]{1,0:T(1,128)}', space=vmem, size = 0x12000, scoped, tag = 'internal scratch']
  %s0 = inlined_call_operand.vmem [shape: f32[2,8,32], index: 0, kind: input, shape index: {}]
  %s1 = inlined_call_operand.vmem [shape: f32[2,8,2], index: 1, kind: input, shape index: {}]
  %s2 = inlined_call_operand.vmem [shape: f32[32,32], index: 2, kind: input, shape index: {}]
  %s3 = inlined_call_operand.vmem [shape: f32[32,8], index: 3, kind: input, shape index: {}]
  %s4 = inlined_call_operand.vmem [shape: f32[4,32], index: 4, kind: input, shape index: {}]
  %s5 = inlined_call_operand.hbm [shape: f32[1,2,32], index: 5, kind: output, shape index: {}]
  %s6 = sld [smem:[#allocation0]]
  $region30: #{tpu_custom_call.1} parent=0
    _
  %s8 = ssub.s32 1, %s6
  %s9 = scalar_select 0, %s8, %s6
  $region1: #{tpu_custom_call.1} parent=0
    #allocation2 [shape = 'u8[1024]{0}', space=vmem, size = 0x400, scoped, tag = 'output window, operand 0, single buffered']
    #allocation3 [shape = 's32[1]{0}', space=sflag, size = 0x4, scoped, tag = 'scoped memory for tpu_custom_call.1']
    %10 = vsyncpa [#allocation3], 0
    // Predicated region
    $region2: #{tpu_custom_call.1} parent=1 // pred_check
      _
    $region3: #{tpu_custom_call.1} parent=1 // pred_check_branch
      %12 = sbr.rel (0) target = $region5
    $region4: #{tpu_custom_call.1} parent=1 // pred_region
      _
    $region5: #{tpu_custom_call.1} parent=1 // pred_fallthru
      _
    // Predicated region
    $region6: #{tpu_custom_call.1} parent=1 // pred_check
      _
    $region7: #{tpu_custom_call.1} parent=1 // pred_check_branch
      %14 = sbr.rel (0) target = $region9
    $region8: #{tpu_custom_call.1} parent=1 // pred_region
      _
    $region9: #{tpu_custom_call.1} parent=1 // pred_fallthru
      _
    // Predicated region
    $region10: #{tpu_custom_call.1} parent=1 // pred_check
      _
    $region11: #{tpu_custom_call.1} parent=1 // pred_check_branch
      %16 = sbr.rel (0) target = $region13
    $region12: #{tpu_custom_call.1} parent=1 // pred_region
      _
    $region13: #{tpu_custom_call.1} parent=1 // pred_fallthru
      _
    // Predicated region
    $region14: #{tpu_custom_call.1} parent=1 // pred_check
      _
    $region15: #{tpu_custom_call.1} parent=1 // pred_check_branch
      %18 = sbr.rel (0) target = $region17
    $region16: #{tpu_custom_call.1} parent=1 // pred_region
      _
    $region17: #{tpu_custom_call.1} parent=1 // pred_fallthru
      _
    // Predicated region
    $region18: #{tpu_custom_call.1} parent=1 // pred_check
      _
    $region19: #{tpu_custom_call.1} parent=1 // pred_check_branch
      %20 = sbr.rel (0) target = $region21
    $region20: #{tpu_custom_call.1} parent=1 // pred_region
      _
    $region21: #{tpu_custom_call.1} parent=1 // pred_fallthru
      _
    %v21 = vld [vmem:[%s0] sm:$0xff]
    %v22 = vld [vmem:[%s0 + $0x8] sm:$0xff]
    %v23 = vld [vmem:[%s1] sm:$0xff]
    %v24 = vld [vmem:[%s1 + $0x8] sm:$0xff]
    %v25 = vld [vmem:[%s2] sm:$0xff]
    %v26 = vld [vmem:[%s2 + $0x8] sm:$0xff]
    %v27 = vld [vmem:[%s2 + $0x10] sm:$0xff]
    %v28 = vld [vmem:[%s2 + $0x18] sm:$0xff]
    %v29 = vld [vmem:[%s3] sm:$0xff]
    %v30 = vld [vmem:[%s3 + $0x8] sm:$0xff]
    %v31 = vld [vmem:[%s3 + $0x10] sm:$0xff]
    %v32 = vld [vmem:[%s3 + $0x18] sm:$0xff]
    %v33 = vld [vmem:[%s4] sm:$0xf]
    %vm34 = vcmask 261120
    %v36 = vsel %vm34, %v21, 0
    %v39 = vsel %vm34, %v22, 0
    %41 = vmatprep.subr.mxu0 0.0
    %v42 = vand.u32 %v25, 4294901760
    %43 = vmatpush1.msra.mxu0 %v42
    %44 = vmatprep.subr.mxu0 0.0
    %v45 = vand.u32 %v26, 4294901760
    %46 = vmatpush1.msra.mxu0 %v45
    %47 = vmatprep.subr.mxu0 0.0
    %v48 = vand.u32 %v27, 4294901760
    %49 = vmatpush1.msra.mxu0 %v48
    %50 = vmatprep.subr.mxu0 0.0
    %v51 = vand.u32 %v28, 4294901760
    %52 = vmatpush1.msra.mxu0 %v51
    %53 = vmatprep.subr.mxu0 0.0
    %54 = vmatpush1.msra.mxu0 0.0
    %55 = vmatprep.subr.mxu0 0.0
    %56 = vmatpush1.msra.mxu0 0.0
    %57 = vmatprep.subr.mxu0 0.0
    %58 = vmatpush1.msra.mxu0 0.0
    %59 = vmatprep.subr.mxu0 0.0
    %60 = vmatpush1.msra.mxu0 0.0
    %61 = vmatprep.subr.mxu0 0.0
    %62 = vmatpush1.msra.mxu0 0.0
    %63 = vmatprep.subr.mxu0 0.0
    %64 = vmatpush1.msra.mxu0 0.0
    %65 = vmatprep.subr.mxu0 0.0
    %66 = vmatpush1.msra.mxu0 0.0
    %67 = vmatprep.subr.mxu0 0.0
    %68 = vmatpush1.msra.mxu0 0.0
    %69 = vmatprep.subr.mxu0 0.0
    %70 = vmatpush1.msra.mxu0 0.0
    %71 = vmatprep.subr.mxu0 0.0
    %72 = vmatpush1.msra.mxu0 0.0
    %73 = vmatprep.subr.mxu0 0.0
    %74 = vmatpush1.msra.mxu0 0.0
    %75 = vmatprep.subr.mxu0 0.0
    %76 = vmatpush1.msra.mxu0 0.0
    %77 = vmatprep.subr.mxu0 0.0
    %78 = vmatpush1.msra.mxu0 0.0
    %79 = vmatprep.subr.mxu0 0.0
    %80 = vmatpush1.msra.mxu0 0.0
    %81 = vmatprep.subr.mxu0 0.0
    %82 = vmatpush1.msra.mxu0 0.0
    %83 = vmatprep.subr.mxu0 0.0
    %84 = vmatpush1.msra.mxu0 0.0
    %85 = vmatprep.subr.mxu0 0.0
    %86 = vmatpush1.msra.mxu0 0.0
    %87 = vmatprep.subr.mxu0 0.0
    %88 = vmatpush1.msra.mxu0 0.0
    %89 = vmatprep.subr.mxu0 0.0
    %90 = vmatpush1.msra.mxu0 0.0
    %91 = vmatprep.subr.mxu0 0.0
    %92 = vmatpush1.msra.mxu0 0.0
    %93 = vmatprep.subr.mxu0 0.0
    %94 = vmatpush1.msra.mxu0 0.0
    %95 = vmatprep.subr.mxu0 0.0
    %96 = vmatpush1.msra.mxu0 0.0
    %97 = vmatprep.subr.mxu0 0.0
    %98 = vmatpush1.msra.mxu0 0.0
    %99 = vmatprep.subr.mxu0 0.0
    %100 = vmatpush1.msra.mxu0 0.0
    %101 = vmatprep.subr.mxu0 0.0
    %102 = vmatpush1.msra.mxu0 0.0
    %103 = vmatprep.subr.mxu0 0.0
    %104 = vmatpush1.msra.mxu0 0.0
    %105 = vmatprep.subr.mxu0 0.0
    %106 = vmatpush1.msra.mxu0 0.0
    %107 = vmatprep.subr.mxu0 0.0
    %108 = vmatpush1.msra.mxu0 0.0
    %109 = vmatprep.mubr.f32.mxu0 0.0
    %v110 = vand.u32 %v36, 4294901760
    %v111 = vsub.f32 %v36, %v110
    %v112 = vand.u32 %v111, 4294901760
    %v113 = vsub.f32 %v111, %v112
    %v114 = vand.u32 %v113, 4294901760
    %115 = vmatmul.mubr.f32.gmra.mrb[0].mxu0 %v114
    %v116 = vpop.f32.mrb[0].mxu0
    %v117 = vadd.f32 0.0, %v116
    %v118 = vpop.f32.mrb[0].mxu0
    %119 = vmatprep.mubr.f32.mxu0 0.0
    %v120 = vand.u32 %v39, 4294901760
    %v121 = vsub.f32 %v39, %v120
    %v122 = vand.u32 %v121, 4294901760
    %v123 = vsub.f32 %v121, %v122
    %v124 = vand.u32 %v123, 4294901760
    %125 = vmatmul.mubr.f32.gmra.mrb[0].mxu0 %v124
    %v126 = vpop.f32.mrb[0].mxu0
    %v127 = vadd.f32 0.0, %v126
    %v128 = vpop.f32.mrb[0].mxu0
    %129 = vdwg.mxu0
    %130 = vmatprep.subr.mxu0 0.0
    %v131 = vand.u32 %v25, 4294901760
    %v132 = vsub.f32 %v25, %v131
    %v133 = vand.u32 %v132, 4294901760
    %v134 = vsub.f32 %v132, %v133
    %v135 = vand.u32 %v134, 4294901760
    %136 = vmatpush1.msra.mxu0 %v135
    %137 = vmatprep.subr.mxu0 0.0
    %v138 = vand.u32 %v26, 4294901760
    %v139 = vsub.f32 %v26, %v138
    %v140 = vand.u32 %v139, 4294901760
    %v141 = vsub.f32 %v139, %v140
    %v142 = vand.u32 %v141, 4294901760
    %143 = vmatpush1.msra.mxu0 %v142
    %144 = vmatprep.subr.mxu0 0.0
    %v145 = vand.u32 %v27, 4294901760
    %v146 = vsub.f32 %v27, %v145
    %v147 = vand.u32 %v146, 4294901760
    %v148 = vsub.f32 %v146, %v147
    %v149 = vand.u32 %v148, 4294901760
    %150 = vmatpush1.msra.mxu0 %v149
    %151 = vmatprep.subr.mxu0 0.0
    %v152 = vand.u32 %v28, 4294901760
    %v153 = vsub.f32 %v28, %v152
    %v154 = vand.u32 %v153, 4294901760
    %v155 = vsub.f32 %v153, %v154
    %v156 = vand.u32 %v155, 4294901760
    %157 = vmatpush1.msra.mxu0 %v156
    %158 = vmatprep.subr.mxu0 0.0
    %159 = vmatpush1.msra.mxu0 0.0
    %160 = vmatprep.subr.mxu0 0.0
    %161 = vmatpush1.msra.mxu0 0.0
    %162 = vmatprep.subr.mxu0 0.0
    %163 = vmatpush1.msra.mxu0 0.0
    %164 = vmatprep.subr.mxu0 0.0
    %165 = vmatpush1.msra.mxu0 0.0
    %166 = vmatprep.subr.mxu0 0.0
    %167 = vmatpush1.msra.mxu0 0.0
    %168 = vmatprep.subr.mxu0 0.0
    %169 = vmatpush1.msra.mxu0 0.0
    %170 = vmatprep.subr.mxu0 0.0
    %171 = vmatpush1.msra.mxu0 0.0
    %172 = vmatprep.subr.mxu0 0.0
    %173 = vmatpush1.msra.mxu0 0.0
    %174 = vmatprep.subr.mxu0 0.0
    %175 = vmatpush1.msra.mxu0 0.0
    %176 = vmatprep.subr.mxu0 0.0
    %177 = vmatpush1.msra.mxu0 0.0
    %178 = vmatprep.subr.mxu0 0.0
    %179 = vmatpush1.msra.mxu0 0.0
    %180 = vmatprep.subr.mxu0 0.0
    %181 = vmatpush1.msra.mxu0 0.0
    %182 = vmatprep.subr.mxu0 0.0
    %183 = vmatpush1.msra.mxu0 0.0
    %184 = vmatprep.subr.mxu0 0.0
    %185 = vmatpush1.msra.mxu0 0.0
    %186 = vmatprep.subr.mxu0 0.0
    %187 = vmatpush1.msra.mxu0 0.0
    %188 = vmatprep.subr.mxu0 0.0
    %189 = vmatpush1.msra.mxu0 0.0
    %190 = vmatprep.subr.mxu0 0.0
    %191 = vmatpush1.msra.mxu0 0.0
    %192 = vmatprep.subr.mxu0 0.0
    %193 = vmatpush1.msra.mxu0 0.0
    %194 = vmatprep.subr.mxu0 0.0
    %195 = vmatpush1.msra.mxu0 0.0
    %196 = vmatprep.subr.mxu0 0.0
    %197 = vmatpush1.msra.mxu0 0.0
    %198 = vmatprep.subr.mxu0 0.0
    %199 = vmatpush1.msra.mxu0 0.0
    %200 = vmatprep.subr.mxu0 0.0
    %201 = vmatpush1.msra.mxu0 0.0
    %202 = vmatprep.subr.mxu0 0.0
    %203 = vmatpush1.msra.mxu0 0.0
    %204 = vmatprep.subr.mxu0 0.0
    %205 = vmatpush1.msra.mxu0 0.0
    %206 = vmatprep.subr.mxu0 0.0
    %207 = vmatpush1.msra.mxu0 0.0
    %208 = vmatprep.subr.mxu0 0.0
    %209 = vmatpush1.msra.mxu0 0.0
    %210 = vmatprep.subr.mxu0 0.0
    %211 = vmatpush1.msra.mxu0 0.0
    %212 = vmatprep.subr.mxu0 0.0
    %213 = vmatpush1.msra.mxu0 0.0
    %214 = vmatprep.mubr.f32.mxu0 0.0
    %v215 = vand.u32 %v36, 4294901760
    %216 = vmatmul.mubr.f32.gmra.mrb[0].mxu0 %v215
    %v217 = vpop.f32.mrb[0].mxu0
    %v218 = vadd.f32 %v117, %v217
    %v219 = vpop.f32.mrb[0].mxu0
    %220 = vmatprep.mubr.f32.mxu0 0.0
    %v221 = vand.u32 %v39, 4294901760
    %222 = vmatmul.mubr.f32.gmra.mrb[0].mxu0 %v221
    %v223 = vpop.f32.mrb[0].mxu0
    %v224 = vadd.f32 %v127, %v223
    %v225 = vpop.f32.mrb[0].mxu0
    %226 = vdwg.mxu0
    %227 = vmatprep.subr.mxu0 0.0
    %v228 = vand.u32 %v25, 4294901760
    %v229 = vsub.f32 %v25, %v228
    %230 = vmatpush1.msra.mxu0 %v229
    %231 = vmatprep.subr.mxu0 0.0
    %v232 = vand.u32 %v26, 4294901760
    %v233 = vsub.f32 %v26, %v232
    %234 = vmatpush1.msra.mxu0 %v233
    %235 = vmatprep.subr.mxu0 0.0
    %v236 = vand.u32 %v27, 4294901760
    %v237 = vsub.f32 %v27, %v236
    %238 = vmatpush1.msra.mxu0 %v237
    %239 = vmatprep.subr.mxu0 0.0
    %v240 = vand.u32 %v28, 4294901760
    %v241 = vsub.f32 %v28, %v240
    %242 = vmatpush1.msra.mxu0 %v241
    %243 = vmatprep.subr.mxu0 0.0
    %244 = vmatpush1.msra.mxu0 0.0
    %245 = vmatprep.subr.mxu0 0.0
    %246 = vmatpush1.msra.mxu0 0.0
    %247 = vmatprep.subr.mxu0 0.0
    %248 = vmatpush1.msra.mxu0 0.0
    %249 = vmatprep.subr.mxu0 0.0
    %250 = vmatpush1.msra.mxu0 0.0
    %251 = vmatprep.subr.mxu0 0.0
    %252 = vmatpush1.msra.mxu0 0.0
    %253 = vmatprep.subr.mxu0 0.0
    %254 = vmatpush1.msra.mxu0 0.0
    %255 = vmatprep.subr.mxu0 0.0
    %256 = vmatpush1.msra.mxu0 0.0
    %257 = vmatprep.subr.mxu0 0.0
    %258 = vmatpush1.msra.mxu0 0.0
    %259 = vmatprep.subr.mxu0 0.0
    %260 = vmatpush1.msra.mxu0 0.0
    %261 = vmatprep.subr.mxu0 0.0
    %262 = vmatpush1.msra.mxu0 0.0
    %263 = vmatprep.subr.mxu0 0.0
    %264 = vmatpush1.msra.mxu0 0.0
    %265 = vmatprep.subr.mxu0 0.0
    %266 = vmatpush1.msra.mxu0 0.0
    %267 = vmatprep.subr.mxu0 0.0
    %268 = vmatpush1.msra.mxu0 0.0
    %269 = vmatprep.subr.mxu0 0.0
    %270 = vmatpush1.msra.mxu0 0.0
    %271 = vmatprep.subr.mxu0 0.0
    %272 = vmatpush1.msra.mxu0 0.0
    %273 = vmatprep.subr.mxu0 0.0
    %274 = vmatpush1.msra.mxu0 0.0
    %275 = vmatprep.subr.mxu0 0.0
    %276 = vmatpush1.msra.mxu0 0.0
    %277 = vmatprep.subr.mxu0 0.0
    %278 = vmatpush1.msra.mxu0 0.0
    %279 = vmatprep.subr.mxu0 0.0
    %280 = vmatpush1.msra.mxu0 0.0
    %281 = vmatprep.subr.mxu0 0.0
    %282 = vmatpush1.msra.mxu0 0.0
    %283 = vmatprep.subr.mxu0 0.0
    %284 = vmatpush1.msra.mxu0 0.0
    %285 = vmatprep.subr.mxu0 0.0
    %286 = vmatpush1.msra.mxu0 0.0
    %287 = vmatprep.subr.mxu0 0.0
    %288 = vmatpush1.msra.mxu0 0.0
    %289 = vmatprep.subr.mxu0 0.0
    %290 = vmatpush1.msra.mxu0 0.0
    %291 = vmatprep.subr.mxu0 0.0
    %292 = vmatpush1.msra.mxu0 0.0
    %293 = vmatprep.subr.mxu0 0.0
    %294 = vmatpush1.msra.mxu0 0.0
    %295 = vmatprep.subr.mxu0 0.0
    %296 = vmatpush1.msra.mxu0 0.0
    %297 = vmatprep.subr.mxu0 0.0
    %298 = vmatpush1.msra.mxu0 0.0
    %299 = vmatprep.mubr.f32.mxu0 0.0
    %v300 = vand.u32 %v36, 4294901760
    %v301 = vsub.f32 %v36, %v300
    %302 = vmatmul.mubr.f32.gmra.mrb[0].mxu0 %v301
    %v303 = vpop.f32.mrb[0].mxu0
    %v304 = vadd.f32 %v218, %v303
    %v305 = vpop.f32.mrb[0].mxu0
    %306 = vmatprep.mubr.f32.mxu0 0.0
    %v307 = vand.u32 %v39, 4294901760
    %v308 = vsub.f32 %v39, %v307
    %309 = vmatmul.mubr.f32.gmra.mrb[0].mxu0 %v308
    %v310 = vpop.f32.mrb[0].mxu0
    %v311 = vadd.f32 %v224, %v310
    %v312 = vpop.f32.mrb[0].mxu0
    %313 = vdwg.mxu0
    %314 = vmatprep.subr.mxu0 0.0
    %v315 = vand.u32 %v25, 4294901760
    %316 = vmatpush1.msra.mxu0 %v315
    %317 = vmatprep.subr.mxu0 0.0
    %v318 = vand.u32 %v26, 4294901760
    %319 = vmatpush1.msra.mxu0 %v318
    %320 = vmatprep.subr.mxu0 0.0
    %v321 = vand.u32 %v27, 4294901760
    %322 = vmatpush1.msra.mxu0 %v321
    %323 = vmatprep.subr.mxu0 0.0
    %v324 = vand.u32 %v28, 4294901760
    %325 = vmatpush1.msra.mxu0 %v324
    %326 = vmatprep.subr.mxu0 0.0
    %327 = vmatpush1.msra.mxu0 0.0
    %328 = vmatprep.subr.mxu0 0.0
    %329 = vmatpush1.msra.mxu0 0.0
    %330 = vmatprep.subr.mxu0 0.0
    %331 = vmatpush1.msra.mxu0 0.0
    %332 = vmatprep.subr.mxu0 0.0
    %333 = vmatpush1.msra.mxu0 0.0
    %334 = vmatprep.subr.mxu0 0.0
    %335 = vmatpush1.msra.mxu0 0.0
    %336 = vmatprep.subr.mxu0 0.0
    %337 = vmatpush1.msra.mxu0 0.0
    %338 = vmatprep.subr.mxu0 0.0
    %339 = vmatpush1.msra.mxu0 0.0
    %340 = vmatprep.subr.mxu0 0.0
    %341 = vmatpush1.msra.mxu0 0.0
    %342 = vmatprep.subr.mxu0 0.0
    %343 = vmatpush1.msra.mxu0 0.0
    %344 = vmatprep.subr.mxu0 0.0
    %345 = vmatpush1.msra.mxu0 0.0
    %346 = vmatprep.subr.mxu0 0.0
    %347 = vmatpush1.msra.mxu0 0.0
    %348 = vmatprep.subr.mxu0 0.0
    %349 = vmatpush1.msra.mxu0 0.0
    %350 = vmatprep.subr.mxu0 0.0
    %351 = vmatpush1.msra.mxu0 0.0
    %352 = vmatprep.subr.mxu0 0.0
    %353 = vmatpush1.msra.mxu0 0.0
    %354 = vmatprep.subr.mxu0 0.0
    %355 = vmatpush1.msra.mxu0 0.0
    %356 = vmatprep.subr.mxu0 0.0
    %357 = vmatpush1.msra.mxu0 0.0
    %358 = vmatprep.subr.mxu0 0.0
    %359 = vmatpush1.msra.mxu0 0.0
    %360 = vmatprep.subr.mxu0 0.0
    %361 = vmatpush1.msra.mxu0 0.0
    %362 = vmatprep.subr.mxu0 0.0
    %363 = vmatpush1.msra.mxu0 0.0
    %364 = vmatprep.subr.mxu0 0.0
    %365 = vmatpush1.msra.mxu0 0.0
    %366 = vmatprep.subr.mxu0 0.0
    %367 = vmatpush1.msra.mxu0 0.0
    %368 = vmatprep.subr.mxu0 0.0
    %369 = vmatpush1.msra.mxu0 0.0
    %370 = vmatprep.subr.mxu0 0.0
    %371 = vmatpush1.msra.mxu0 0.0
    %372 = vmatprep.subr.mxu0 0.0
    %373 = vmatpush1.msra.mxu0 0.0
    %374 = vmatprep.subr.mxu0 0.0
    %375 = vmatpush1.msra.mxu0 0.0
    %376 = vmatprep.subr.mxu0 0.0
    %377 = vmatpush1.msra.mxu0 0.0
    %378 = vmatprep.subr.mxu0 0.0
    %379 = vmatpush1.msra.mxu0 0.0
    %380 = vmatprep.subr.mxu0 0.0
    %381 = vmatpush1.msra.mxu0 0.0
    %382 = vmatprep.mubr.f32.mxu0 0.0
    %v383 = vand.u32 %v36, 4294901760
    %v384 = vsub.f32 %v36, %v383
    %v385 = vand.u32 %v384, 4294901760
    %386 = vmatmul.mubr.f32.gmra.mrb[0].mxu0 %v385
    %v387 = vpop.f32.mrb[0].mxu0
    %v388 = vadd.f32 %v304, %v387
    %v389 = vpop.f32.mrb[0].mxu0
    %390 = vmatprep.mubr.f32.mxu0 0.0
    %v391 = vand.u32 %v39, 4294901760
    %v392 = vsub.f32 %v39, %v391
    %v393 = vand.u32 %v392, 4294901760
    %394 = vmatmul.mubr.f32.gmra.mrb[0].mxu0 %v393
    %v395 = vpop.f32.mrb[0].mxu0
    %v396 = vadd.f32 %v311, %v395
    %v397 = vpop.f32.mrb[0].mxu0
    %398 = vdwg.mxu0
    %399 = vmatprep.subr.mxu0 0.0
    %v400 = vand.u32 %v25, 4294901760
    %v401 = vsub.f32 %v25, %v400
    %v402 = vand.u32 %v401, 4294901760
    %403 = vmatpush1.msra.mxu0 %v402
    %404 = vmatprep.subr.mxu0 0.0
    %v405 = vand.u32 %v26, 4294901760
    %v406 = vsub.f32 %v26, %v405
    %v407 = vand.u32 %v406, 4294901760
    %408 = vmatpush1.msra.mxu0 %v407
    %409 = vmatprep.subr.mxu0 0.0
    %v410 = vand.u32 %v27, 4294901760
    %v411 = vsub.f32 %v27, %v410
    %v412 = vand.u32 %v411, 4294901760
    %413 = vmatpush1.msra.mxu0 %v412
    %414 = vmatprep.subr.mxu0 0.0
    %v415 = vand.u32 %v28, 4294901760
    %v416 = vsub.f32 %v28, %v415
    %v417 = vand.u32 %v416, 4294901760
    %418 = vmatpush1.msra.mxu0 %v417
    %419 = vmatprep.subr.mxu0 0.0
    %420 = vmatpush1.msra.mxu0 0.0
    %421 = vmatprep.subr.mxu0 0.0
    %422 = vmatpush1.msra.mxu0 0.0
    %423 = vmatprep.subr.mxu0 0.0
    %424 = vmatpush1.msra.mxu0 0.0
    %425 = vmatprep.subr.mxu0 0.0
    %426 = vmatpush1.msra.mxu0 0.0
    %427 = vmatprep.subr.mxu0 0.0
    %428 = vmatpush1.msra.mxu0 0.0
    %429 = vmatprep.subr.mxu0 0.0
    %430 = vmatpush1.msra.mxu0 0.0
    %431 = vmatprep.subr.mxu0 0.0
    %432 = vmatpush1.msra.mxu0 0.0
    %433 = vmatprep.subr.mxu0 0.0
    %434 = vmatpush1.msra.mxu0 0.0
    %435 = vmatprep.subr.mxu0 0.0
    %436 = vmatpush1.msra.mxu0 0.0
    %437 = vmatprep.subr.mxu0 0.0
    %438 = vmatpush1.msra.mxu0 0.0
    %439 = vmatprep.subr.mxu0 0.0
    %440 = vmatpush1.msra.mxu0 0.0
    %441 = vmatprep.subr.mxu0 0.0
    %442 = vmatpush1.msra.mxu0 0.0
    %443 = vmatprep.subr.mxu0 0.0
    %444 = vmatpush1.msra.mxu0 0.0
    %445 = vmatprep.subr.mxu0 0.0
    %446 = vmatpush1.msra.mxu0 0.0
    %447 = vmatprep.subr.mxu0 0.0
    %448 = vmatpush1.msra.mxu0 0.0
    %449 = vmatprep.subr.mxu0 0.0
    %450 = vmatpush1.msra.mxu0 0.0
    %451 = vmatprep.subr.mxu0 0.0
    %452 = vmatpush1.msra.mxu0 0.0
    %453 = vmatprep.subr.mxu0 0.0
    %454 = vmatpush1.msra.mxu0 0.0
    %455 = vmatprep.subr.mxu0 0.0
    %456 = vmatpush1.msra.mxu0 0.0
    %457 = vmatprep.subr.mxu0 0.0
    %458 = vmatpush1.msra.mxu0 0.0
    %459 = vmatprep.subr.mxu0 0.0
    %460 = vmatpush1.msra.mxu0 0.0
    %461 = vmatprep.subr.mxu0 0.0
    %462 = vmatpush1.msra.mxu0 0.0
    %463 = vmatprep.subr.mxu0 0.0
    %464 = vmatpush1.msra.mxu0 0.0
    %465 = vmatprep.subr.mxu0 0.0
    %466 = vmatpush1.msra.mxu0 0.0
    %467 = vmatprep.subr.mxu0 0.0
    %468 = vmatpush1.msra.mxu0 0.0
    %469 = vmatprep.subr.mxu0 0.0
    %470 = vmatpush1.msra.mxu0 0.0
    %471 = vmatprep.subr.mxu0 0.0
    %472 = vmatpush1.msra.mxu0 0.0
    %473 = vmatprep.subr.mxu0 0.0
    %474 = vmatpush1.msra.mxu0 0.0
    %475 = vmatprep.mubr.f32.mxu0 0.0
    %v476 = vand.u32 %v36, 4294901760
    %477 = vmatmul.mubr.f32.gmra.mrb[0].mxu0 %v476
    %v478 = vpop.f32.mrb[0].mxu0
    %v479 = vadd.f32 %v388, %v478
    %v480 = vpop.f32.mrb[0].mxu0
    %481 = vmatprep.mubr.f32.mxu0 0.0
    %v482 = vand.u32 %v39, 4294901760
    %483 = vmatmul.mubr.f32.gmra.mrb[0].mxu0 %v482
    %v484 = vpop.f32.mrb[0].mxu0
    %v485 = vadd.f32 %v396, %v484
    %v486 = vpop.f32.mrb[0].mxu0
    %487 = vdwg.mxu0
    %488 = vmatprep.subr.mxu0 0.0
    %v489 = vand.u32 %v25, 4294901760
    %490 = vmatpush1.msra.mxu0 %v489
    %491 = vmatprep.subr.mxu0 0.0
    %v492 = vand.u32 %v26, 4294901760
    %493 = vmatpush1.msra.mxu0 %v492
    %494 = vmatprep.subr.mxu0 0.0
    %v495 = vand.u32 %v27, 4294901760
    %496 = vmatpush1.msra.mxu0 %v495
    %497 = vmatprep.subr.mxu0 0.0
    %v498 = vand.u32 %v28, 4294901760
    %499 = vmatpush1.msra.mxu0 %v498
    %500 = vmatprep.subr.mxu0 0.0
    %501 = vmatpush1.msra.mxu0 0.0
    %502 = vmatprep.subr.mxu0 0.0
    %503 = vmatpush1.msra.mxu0 0.0
    %504 = vmatprep.subr.mxu0 0.0
    %505 = vmatpush1.msra.mxu0 0.0
    %506 = vmatprep.subr.mxu0 0.0
    %507 = vmatpush1.msra.mxu0 0.0
    %508 = vmatprep.subr.mxu0 0.0
    %509 = vmatpush1.msra.mxu0 0.0
    %510 = vmatprep.subr.mxu0 0.0
    %511 = vmatpush1.msra.mxu0 0.0
    %512 = vmatprep.subr.mxu0 0.0
    %513 = vmatpush1.msra.mxu0 0.0
    %514 = vmatprep.subr.mxu0 0.0
    %515 = vmatpush1.msra.mxu0 0.0
    %516 = vmatprep.subr.mxu0 0.0
    %517 = vmatpush1.msra.mxu0 0.0
    %518 = vmatprep.subr.mxu0 0.0
    %519 = vmatpush1.msra.mxu0 0.0
    %520 = vmatprep.subr.mxu0 0.0
    %521 = vmatpush1.msra.mxu0 0.0
    %522 = vmatprep.subr.mxu0 0.0
    %523 = vmatpush1.msra.mxu0 0.0
    %524 = vmatprep.subr.mxu0 0.0
    %525 = vmatpush1.msra.mxu0 0.0
    %526 = vmatprep.subr.mxu0 0.0
    %527 = vmatpush1.msra.mxu0 0.0
    %528 = vmatprep.subr.mxu0 0.0
    %529 = vmatpush1.msra.mxu0 0.0
    %530 = vmatprep.subr.mxu0 0.0
    %531 = vmatpush1.msra.mxu0 0.0
    %532 = vmatprep.subr.mxu0 0.0
    %533 = vmatpush1.msra.mxu0 0.0
    %534 = vmatprep.subr.mxu0 0.0
    %535 = vmatpush1.msra.mxu0 0.0
    %536 = vmatprep.subr.mxu0 0.0
    %537 = vmatpush1.msra.mxu0 0.0
    %538 = vmatprep.subr.mxu0 0.0
    %539 = vmatpush1.msra.mxu0 0.0
    %540 = vmatprep.subr.mxu0 0.0
    %541 = vmatpush1.msra.mxu0 0.0
    %542 = vmatprep.subr.mxu0 0.0
    %543 = vmatpush1.msra.mxu0 0.0
    %544 = vmatprep.subr.mxu0 0.0
    %545 = vmatpush1.msra.mxu0 0.0
    %546 = vmatprep.subr.mxu0 0.0
    %547 = vmatpush1.msra.mxu0 0.0
    %548 = vmatprep.subr.mxu0 0.0
    %549 = vmatpush1.msra.mxu0 0.0
    %550 = vmatprep.subr.mxu0 0.0
    %551 = vmatpush1.msra.mxu0 0.0
    %552 = vmatprep.subr.mxu0 0.0
    %553 = vmatpush1.msra.mxu0 0.0
    %554 = vmatprep.subr.mxu0 0.0
    %555 = vmatpush1.msra.mxu0 0.0
    %556 = vmatprep.mubr.f32.mxu0 0.0
    %v557 = vand.u32 %v36, 4294901760
    %558 = vmatmul.mubr.f32.gmra.mrb[0].mxu0 %v557
    %v559 = vpop.f32.mrb[0].mxu0
    %v560 = vadd.f32 %v479, %v559
    %v561 = vpop.f32.mrb[0].mxu0
    %562 = vmatprep.mubr.f32.mxu0 0.0
    %v563 = vand.u32 %v39, 4294901760
    %564 = vmatmul.mubr.f32.gmra.mrb[0].mxu0 %v563
    %v565 = vpop.f32.mrb[0].mxu0
    %v566 = vadd.f32 %v485, %v565
    %v567 = vpop.f32.mrb[0].mxu0
    %568 = vdwg.mxu0
    %v570 = vsel %vm34, %v560, 0
    %v573 = vsel %vm34, %v566, 0
    %575 = vmatprep.subr.mxu0 0.0
    %v576 = vand.u32 %v29, 4294901760
    %577 = vmatpush1.msra.mxu0 %v576
    %578 = vmatprep.subr.mxu0 0.0
    %v579 = vand.u32 %v30, 4294901760
    %580 = vmatpush1.msra.mxu0 %v579
    %581 = vmatprep.subr.mxu0 0.0
    %v582 = vand.u32 %v31, 4294901760
    %583 = vmatpush1.msra.mxu0 %v582
    %584 = vmatprep.subr.mxu0 0.0
    %v585 = vand.u32 %v32, 4294901760
    %586 = vmatpush1.msra.mxu0 %v585
    %587 = vmatprep.subr.mxu0 0.0
    %588 = vmatpush1.msra.mxu0 0.0
    %589 = vmatprep.subr.mxu0 0.0
    %590 = vmatpush1.msra.mxu0 0.0
    %591 = vmatprep.subr.mxu0 0.0
    %592 = vmatpush1.msra.mxu0 0.0
    %593 = vmatprep.subr.mxu0 0.0
    %594 = vmatpush1.msra.mxu0 0.0
    %595 = vmatprep.subr.mxu0 0.0
    %596 = vmatpush1.msra.mxu0 0.0
    %597 = vmatprep.subr.mxu0 0.0
    %598 = vmatpush1.msra.mxu0 0.0
    %599 = vmatprep.subr.mxu0 0.0
    %600 = vmatpush1.msra.mxu0 0.0
    %601 = vmatprep.subr.mxu0 0.0
    %602 = vmatpush1.msra.mxu0 0.0
    %603 = vmatprep.subr.mxu0 0.0
    %604 = vmatpush1.msra.mxu0 0.0
    %605 = vmatprep.subr.mxu0 0.0
    %606 = vmatpush1.msra.mxu0 0.0
    %607 = vmatprep.subr.mxu0 0.0
    %608 = vmatpush1.msra.mxu0 0.0
    %609 = vmatprep.subr.mxu0 0.0
    %610 = vmatpush1.msra.mxu0 0.0
    %611 = vmatprep.subr.mxu0 0.0
    %612 = vmatpush1.msra.mxu0 0.0
    %613 = vmatprep.subr.mxu0 0.0
    %614 = vmatpush1.msra.mxu0 0.0
    %615 = vmatprep.subr.mxu0 0.0
    %616 = vmatpush1.msra.mxu0 0.0
    %617 = vmatprep.subr.mxu0 0.0
    %618 = vmatpush1.msra.mxu0 0.0
    %619 = vmatprep.subr.mxu0 0.0
    %620 = vmatpush1.msra.mxu0 0.0
    %621 = vmatprep.subr.mxu0 0.0
    %622 = vmatpush1.msra.mxu0 0.0
    %623 = vmatprep.subr.mxu0 0.0
    %624 = vmatpush1.msra.mxu0 0.0
    %625 = vmatprep.subr.mxu0 0.0
    %626 = vmatpush1.msra.mxu0 0.0
    %627 = vmatprep.subr.mxu0 0.0
    %628 = vmatpush1.msra.mxu0 0.0
    %629 = vmatprep.subr.mxu0 0.0
    %630 = vmatpush1.msra.mxu0 0.0
    %631 = vmatprep.subr.mxu0 0.0
    %632 = vmatpush1.msra.mxu0 0.0
    %633 = vmatprep.subr.mxu0 0.0
    %634 = vmatpush1.msra.mxu0 0.0
    %635 = vmatprep.subr.mxu0 0.0
    %636 = vmatpush1.msra.mxu0 0.0
    %637 = vmatprep.subr.mxu0 0.0
    %638 = vmatpush1.msra.mxu0 0.0
    %639 = vmatprep.subr.mxu0 0.0
    %640 = vmatpush1.msra.mxu0 0.0
    %641 = vmatprep.subr.mxu0 0.0
    %642 = vmatpush1.msra.mxu0 0.0
    %643 = vmatprep.mubr.f32.mxu0 0.0
    %v644 = vand.u32 %v570, 4294901760
    %v645 = vsub.f32 %v570, %v644
    %v646 = vand.u32 %v645, 4294901760
    %v647 = vsub.f32 %v645, %v646
    %v648 = vand.u32 %v647, 4294901760
    %649 = vmatmul.mubr.f32.gmra.mrb[0].mxu0 %v648
    %v650 = vpop.f32.mrb[0].mxu0
    %v651 = vadd.f32 0.0, %v650
    %v652 = vpop.f32.mrb[0].mxu0
    %653 = vmatprep.mubr.f32.mxu0 0.0
    %v654 = vand.u32 %v573, 4294901760
    %v655 = vsub.f32 %v573, %v654
    %v656 = vand.u32 %v655, 4294901760
    %v657 = vsub.f32 %v655, %v656
    %v658 = vand.u32 %v657, 4294901760
    %659 = vmatmul.mubr.f32.gmra.mrb[0].mxu0 %v658
    %v660 = vpop.f32.mrb[0].mxu0
    %v661 = vadd.f32 0.0, %v660
    %v662 = vpop.f32.mrb[0].mxu0
    %663 = vdwg.mxu0
    %664 = vmatprep.subr.mxu0 0.0
    %v665 = vand.u32 %v29, 4294901760
    %v666 = vsub.f32 %v29, %v665
    %v667 = vand.u32 %v666, 4294901760
    %v668 = vsub.f32 %v666, %v667
    %v669 = vand.u32 %v668, 4294901760
    %670 = vmatpush1.msra.mxu0 %v669
    %671 = vmatprep.subr.mxu0 0.0
    %v672 = vand.u32 %v30, 4294901760
    %v673 = vsub.f32 %v30, %v672
    %v674 = vand.u32 %v673, 4294901760
    %v675 = vsub.f32 %v673, %v674
    %v676 = vand.u32 %v675, 4294901760
    %677 = vmatpush1.msra.mxu0 %v676
    %678 = vmatprep.subr.mxu0 0.0
    %v679 = vand.u32 %v31, 4294901760
    %v680 = vsub.f32 %v31, %v679
    %v681 = vand.u32 %v680, 4294901760
    %v682 = vsub.f32 %v680, %v681
    %v683 = vand.u32 %v682, 4294901760
    %684 = vmatpush1.msra.mxu0 %v683
    %685 = vmatprep.subr.mxu0 0.0
    %v686 = vand.u32 %v32, 4294901760
    %v687 = vsub.f32 %v32, %v686
    %v688 = vand.u32 %v687, 4294901760
    %v689 = vsub.f32 %v687, %v688
    %v690 = vand.u32 %v689, 4294901760
    %691 = vmatpush1.msra.mxu0 %v690
    %692 = vmatprep.subr.mxu0 0.0
    %693 = vmatpush1.msra.mxu0 0.0
    %694 = vmatprep.subr.mxu0 0.0
    %695 = vmatpush1.msra.mxu0 0.0
    %696 = vmatprep.subr.mxu0 0.0
    %697 = vmatpush1.msra.mxu0 0.0
    %698 = vmatprep.subr.mxu0 0.0
    %699 = vmatpush1.msra.mxu0 0.0
    %700 = vmatprep.subr.mxu0 0.0
    %701 = vmatpush1.msra.mxu0 0.0
    %702 = vmatprep.subr.mxu0 0.0
    %703 = vmatpush1.msra.mxu0 0.0
    %704 = vmatprep.subr.mxu0 0.0
    %705 = vmatpush1.msra.mxu0 0.0
    %706 = vmatprep.subr.mxu0 0.0
    %707 = vmatpush1.msra.mxu0 0.0
    %708 = vmatprep.subr.mxu0 0.0
    %709 = vmatpush1.msra.mxu0 0.0
    %710 = vmatprep.subr.mxu0 0.0
    %711 = vmatpush1.msra.mxu0 0.0
    %712 = vmatprep.subr.mxu0 0.0
    %713 = vmatpush1.msra.mxu0 0.0
    %714 = vmatprep.subr.mxu0 0.0
    %715 = vmatpush1.msra.mxu0 0.0
    %716 = vmatprep.subr.mxu0 0.0
    %717 = vmatpush1.msra.mxu0 0.0
    %718 = vmatprep.subr.mxu0 0.0
    %719 = vmatpush1.msra.mxu0 0.0
    %720 = vmatprep.subr.mxu0 0.0
    %721 = vmatpush1.msra.mxu0 0.0
    %722 = vmatprep.subr.mxu0 0.0
    %723 = vmatpush1.msra.mxu0 0.0
    %724 = vmatprep.subr.mxu0 0.0
    %725 = vmatpush1.msra.mxu0 0.0
    %726 = vmatprep.subr.mxu0 0.0
    %727 = vmatpush1.msra.mxu0 0.0
    %728 = vmatprep.subr.mxu0 0.0
    %729 = vmatpush1.msra.mxu0 0.0
    %730 = vmatprep.subr.mxu0 0.0
    %731 = vmatpush1.msra.mxu0 0.0
    %732 = vmatprep.subr.mxu0 0.0
    %733 = vmatpush1.msra.mxu0 0.0
    %734 = vmatprep.subr.mxu0 0.0
    %735 = vmatpush1.msra.mxu0 0.0
    %736 = vmatprep.subr.mxu0 0.0
    %737 = vmatpush1.msra.mxu0 0.0
    %738 = vmatprep.subr.mxu0 0.0
    %739 = vmatpush1.msra.mxu0 0.0
    %740 = vmatprep.subr.mxu0 0.0
    %741 = vmatpush1.msra.mxu0 0.0
    %742 = vmatprep.subr.mxu0 0.0
    %743 = vmatpush1.msra.mxu0 0.0
    %744 = vmatprep.subr.mxu0 0.0
    %745 = vmatpush1.msra.mxu0 0.0
    %746 = vmatprep.subr.mxu0 0.0
    %747 = vmatpush1.msra.mxu0 0.0
    %748 = vmatprep.mubr.f32.mxu0 0.0
    %v749 = vand.u32 %v570, 4294901760
    %750 = vmatmul.mubr.f32.gmra.mrb[0].mxu0 %v749
    %v751 = vpop.f32.mrb[0].mxu0
    %v752 = vadd.f32 %v651, %v751
    %v753 = vpop.f32.mrb[0].mxu0
    %754 = vmatprep.mubr.f32.mxu0 0.0
    %v755 = vand.u32 %v573, 4294901760
    %756 = vmatmul.mubr.f32.gmra.mrb[0].mxu0 %v755
    %v757 = vpop.f32.mrb[0].mxu0
    %v758 = vadd.f32 %v661, %v757
    %v759 = vpop.f32.mrb[0].mxu0
    %760 = vdwg.mxu0
    %761 = vmatprep.subr.mxu0 0.0
    %v762 = vand.u32 %v29, 4294901760
    %v763 = vsub.f32 %v29, %v762
    %764 = vmatpush1.msra.mxu0 %v763
    %765 = vmatprep.subr.mxu0 0.0
    %v766 = vand.u32 %v30, 4294901760
    %v767 = vsub.f32 %v30, %v766
    %768 = vmatpush1.msra.mxu0 %v767
    %769 = vmatprep.subr.mxu0 0.0
    %v770 = vand.u32 %v31, 4294901760
    %v771 = vsub.f32 %v31, %v770
    %772 = vmatpush1.msra.mxu0 %v771
    %773 = vmatprep.subr.mxu0 0.0
    %v774 = vand.u32 %v32, 4294901760
    %v775 = vsub.f32 %v32, %v774
    %776 = vmatpush1.msra.mxu0 %v775
    %777 = vmatprep.subr.mxu0 0.0
    %778 = vmatpush1.msra.mxu0 0.0
    %779 = vmatprep.subr.mxu0 0.0
    %780 = vmatpush1.msra.mxu0 0.0
    %781 = vmatprep.subr.mxu0 0.0
    %782 = vmatpush1.msra.mxu0 0.0
    %783 = vmatprep.subr.mxu0 0.0
    %784 = vmatpush1.msra.mxu0 0.0
    %785 = vmatprep.subr.mxu0 0.0
    %786 = vmatpush1.msra.mxu0 0.0
    %787 = vmatprep.subr.mxu0 0.0
    %788 = vmatpush1.msra.mxu0 0.0
    %789 = vmatprep.subr.mxu0 0.0
    %790 = vmatpush1.msra.mxu0 0.0
    %791 = vmatprep.subr.mxu0 0.0
    %792 = vmatpush1.msra.mxu0 0.0
    %793 = vmatprep.subr.mxu0 0.0
    %794 = vmatpush1.msra.mxu0 0.0
    %795 = vmatprep.subr.mxu0 0.0
    %796 = vmatpush1.msra.mxu0 0.0
    %797 = vmatprep.subr.mxu0 0.0
    %798 = vmatpush1.msra.mxu0 0.0
    %799 = vmatprep.subr.mxu0 0.0
    %800 = vmatpush1.msra.mxu0 0.0
    %801 = vmatprep.subr.mxu0 0.0
    %802 = vmatpush1.msra.mxu0 0.0
    %803 = vmatprep.subr.mxu0 0.0
    %804 = vmatpush1.msra.mxu0 0.0
    %805 = vmatprep.subr.mxu0 0.0
    %806 = vmatpush1.msra.mxu0 0.0
    %807 = vmatprep.subr.mxu0 0.0
    %808 = vmatpush1.msra.mxu0 0.0
    %809 = vmatprep.subr.mxu0 0.0
    %810 = vmatpush1.msra.mxu0 0.0
    %811 = vmatprep.subr.mxu0 0.0
    %812 = vmatpush1.msra.mxu0 0.0
    %813 = vmatprep.subr.mxu0 0.0
    %814 = vmatpush1.msra.mxu0 0.0
    %815 = vmatprep.subr.mxu0 0.0
    %816 = vmatpush1.msra.mxu0 0.0
    %817 = vmatprep.subr.mxu0 0.0
    %818 = vmatpush1.msra.mxu0 0.0
    %819 = vmatprep.subr.mxu0 0.0
    %820 = vmatpush1.msra.mxu0 0.0
    %821 = vmatprep.subr.mxu0 0.0
    %822 = vmatpush1.msra.mxu0 0.0
    %823 = vmatprep.subr.mxu0 0.0
    %824 = vmatpush1.msra.mxu0 0.0
    %825 = vmatprep.subr.mxu0 0.0
    %826 = vmatpush1.msra.mxu0 0.0
    %827 = vmatprep.subr.mxu0 0.0
    %828 = vmatpush1.msra.mxu0 0.0
    %829 = vmatprep.subr.mxu0 0.0
    %830 = vmatpush1.msra.mxu0 0.0
    %831 = vmatprep.subr.mxu0 0.0
    %832 = vmatpush1.msra.mxu0 0.0
    %833 = vmatprep.mubr.f32.mxu0 0.0
    %v834 = vand.u32 %v570, 4294901760
    %v835 = vsub.f32 %v570, %v834
    %836 = vmatmul.mubr.f32.gmra.mrb[0].mxu0 %v835
    %v837 = vpop.f32.mrb[0].mxu0
    %v838 = vadd.f32 %v752, %v837
    %v839 = vpop.f32.mrb[0].mxu0
    %840 = vmatprep.mubr.f32.mxu0 0.0
    %v841 = vand.u32 %v573, 4294901760
    %v842 = vsub.f32 %v573, %v841
    %843 = vmatmul.mubr.f32.gmra.mrb[0].mxu0 %v842
    %v844 = vpop.f32.mrb[0].mxu0
    %v845 = vadd.f32 %v758, %v844
    %v846 = vpop.f32.mrb[0].mxu0
    %847 = vdwg.mxu0
    %848 = vmatprep.subr.mxu0 0.0
    %v849 = vand.u32 %v29, 4294901760
    %850 = vmatpush1.msra.mxu0 %v849
    %851 = vmatprep.subr.mxu0 0.0
    %v852 = vand.u32 %v30, 4294901760
    %853 = vmatpush1.msra.mxu0 %v852
    %854 = vmatprep.subr.mxu0 0.0
    %v855 = vand.u32 %v31, 4294901760
    %856 = vmatpush1.msra.mxu0 %v855
    %857 = vmatprep.subr.mxu0 0.0
    %v858 = vand.u32 %v32, 4294901760
    %859 = vmatpush1.msra.mxu0 %v858
    %860 = vmatprep.subr.mxu0 0.0
    %861 = vmatpush1.msra.mxu0 0.0
    %862 = vmatprep.subr.mxu0 0.0
    %863 = vmatpush1.msra.mxu0 0.0
    %864 = vmatprep.subr.mxu0 0.0
    %865 = vmatpush1.msra.mxu0 0.0
    %866 = vmatprep.subr.mxu0 0.0
    %867 = vmatpush1.msra.mxu0 0.0
    %868 = vmatprep.subr.mxu0 0.0
    %869 = vmatpush1.msra.mxu0 0.0
    %870 = vmatprep.subr.mxu0 0.0
    %871 = vmatpush1.msra.mxu0 0.0
    %872 = vmatprep.subr.mxu0 0.0
    %873 = vmatpush1.msra.mxu0 0.0
    %874 = vmatprep.subr.mxu0 0.0
    %875 = vmatpush1.msra.mxu0 0.0
    %876 = vmatprep.subr.mxu0 0.0
    %877 = vmatpush1.msra.mxu0 0.0
    %878 = vmatprep.subr.mxu0 0.0
    %879 = vmatpush1.msra.mxu0 0.0
    %880 = vmatprep.subr.mxu0 0.0
    %881 = vmatpush1.msra.mxu0 0.0
    %882 = vmatprep.subr.mxu0 0.0
    %883 = vmatpush1.msra.mxu0 0.0
    %884 = vmatprep.subr.mxu0 0.0
    %885 = vmatpush1.msra.mxu0 0.0
    %886 = vmatprep.subr.mxu0 0.0
    %887 = vmatpush1.msra.mxu0 0.0
    %888 = vmatprep.subr.mxu0 0.0
    %889 = vmatpush1.msra.mxu0 0.0
    %890 = vmatprep.subr.mxu0 0.0
    %891 = vmatpush1.msra.mxu0 0.0
    %892 = vmatprep.subr.mxu0 0.0
    %893 = vmatpush1.msra.mxu0 0.0
    %894 = vmatprep.subr.mxu0 0.0
    %895 = vmatpush1.msra.mxu0 0.0
    %896 = vmatprep.subr.mxu0 0.0
    %897 = vmatpush1.msra.mxu0 0.0
    %898 = vmatprep.subr.mxu0 0.0
    %899 = vmatpush1.msra.mxu0 0.0
    %900 = vmatprep.subr.mxu0 0.0
    %901 = vmatpush1.msra.mxu0 0.0
    %902 = vmatprep.subr.mxu0 0.0
    %903 = vmatpush1.msra.mxu0 0.0
    %904 = vmatprep.subr.mxu0 0.0
    %905 = vmatpush1.msra.mxu0 0.0
    %906 = vmatprep.subr.mxu0 0.0
    %907 = vmatpush1.msra.mxu0 0.0
    %908 = vmatprep.subr.mxu0 0.0
    %909 = vmatpush1.msra.mxu0 0.0
    %910 = vmatprep.subr.mxu0 0.0
    %911 = vmatpush1.msra.mxu0 0.0
    %912 = vmatprep.subr.mxu0 0.0
    %913 = vmatpush1.msra.mxu0 0.0
    %914 = vmatprep.subr.mxu0 0.0
    %915 = vmatpush1.msra.mxu0 0.0
    %916 = vmatprep.mubr.f32.mxu0 0.0
    %v917 = vand.u32 %v570, 4294901760
    %v918 = vsub.f32 %v570, %v917
    %v919 = vand.u32 %v918, 4294901760
    %920 = vmatmul.mubr.f32.gmra.mrb[0].mxu0 %v919
    %v921 = vpop.f32.mrb[0].mxu0
    %v922 = vadd.f32 %v838, %v921
    %v923 = vpop.f32.mrb[0].mxu0
    %924 = vmatprep.mubr.f32.mxu0 0.0
    %v925 = vand.u32 %v573, 4294901760
    %v926 = vsub.f32 %v573, %v925
    %v927 = vand.u32 %v926, 4294901760
    %928 = vmatmul.mubr.f32.gmra.mrb[0].mxu0 %v927
    %v929 = vpop.f32.mrb[0].mxu0
    %v930 = vadd.f32 %v845, %v929
    %v931 = vpop.f32.mrb[0].mxu0
    %932 = vdwg.mxu0
    %933 = vmatprep.subr.mxu0 0.0
    %v934 = vand.u32 %v29, 4294901760
    %v935 = vsub.f32 %v29, %v934
    %v936 = vand.u32 %v935, 4294901760
    %937 = vmatpush1.msra.mxu0 %v936
    %938 = vmatprep.subr.mxu0 0.0
    %v939 = vand.u32 %v30, 4294901760
    %v940 = vsub.f32 %v30, %v939
    %v941 = vand.u32 %v940, 4294901760
    %942 = vmatpush1.msra.mxu0 %v941
    %943 = vmatprep.subr.mxu0 0.0
    %v944 = vand.u32 %v31, 4294901760
    %v945 = vsub.f32 %v31, %v944
    %v946 = vand.u32 %v945, 4294901760
    %947 = vmatpush1.msra.mxu0 %v946
    %948 = vmatprep.subr.mxu0 0.0
    %v949 = vand.u32 %v32, 4294901760
    %v950 = vsub.f32 %v32, %v949
    %v951 = vand.u32 %v950, 4294901760
    %952 = vmatpush1.msra.mxu0 %v951
    %953 = vmatprep.subr.mxu0 0.0
    %954 = vmatpush1.msra.mxu0 0.0
    %955 = vmatprep.subr.mxu0 0.0
    %956 = vmatpush1.msra.mxu0 0.0
    %957 = vmatprep.subr.mxu0 0.0
    %958 = vmatpush1.msra.mxu0 0.0
    %959 = vmatprep.subr.mxu0 0.0
    %960 = vmatpush1.msra.mxu0 0.0
    %961 = vmatprep.subr.mxu0 0.0
    %962 = vmatpush1.msra.mxu0 0.0
    %963 = vmatprep.subr.mxu0 0.0
    %964 = vmatpush1.msra.mxu0 0.0
    %965 = vmatprep.subr.mxu0 0.0
    %966 = vmatpush1.msra.mxu0 0.0
    %967 = vmatprep.subr.mxu0 0.0
    %968 = vmatpush1.msra.mxu0 0.0
    %969 = vmatprep.subr.mxu0 0.0
    %970 = vmatpush1.msra.mxu0 0.0
    %971 = vmatprep.subr.mxu0 0.0
    %972 = vmatpush1.msra.mxu0 0.0
    %973 = vmatprep.subr.mxu0 0.0
    %974 = vmatpush1.msra.mxu0 0.0
    %975 = vmatprep.subr.mxu0 0.0
    %976 = vmatpush1.msra.mxu0 0.0
    %977 = vmatprep.subr.mxu0 0.0
    %978 = vmatpush1.msra.mxu0 0.0
    %979 = vmatprep.subr.mxu0 0.0
    %980 = vmatpush1.msra.mxu0 0.0
    %981 = vmatprep.subr.mxu0 0.0
    %982 = vmatpush1.msra.mxu0 0.0
    %983 = vmatprep.subr.mxu0 0.0
    %984 = vmatpush1.msra.mxu0 0.0
    %985 = vmatprep.subr.mxu0 0.0
    %986 = vmatpush1.msra.mxu0 0.0
    %987 = vmatprep.subr.mxu0 0.0
    %988 = vmatpush1.msra.mxu0 0.0
    %989 = vmatprep.subr.mxu0 0.0
    %990 = vmatpush1.msra.mxu0 0.0
    %991 = vmatprep.subr.mxu0 0.0
    %992 = vmatpush1.msra.mxu0 0.0
    %993 = vmatprep.subr.mxu0 0.0
    %994 = vmatpush1.msra.mxu0 0.0
    %995 = vmatprep.subr.mxu0 0.0
    %996 = vmatpush1.msra.mxu0 0.0
    %997 = vmatprep.subr.mxu0 0.0
    %998 = vmatpush1.msra.mxu0 0.0
    %999 = vmatprep.subr.mxu0 0.0
    %1000 = vmatpush1.msra.mxu0 0.0
    %1001 = vmatprep.subr.mxu0 0.0
    %1002 = vmatpush1.msra.mxu0 0.0
    %1003 = vmatprep.subr.mxu0 0.0
    %1004 = vmatpush1.msra.mxu0 0.0
    %1005 = vmatprep.subr.mxu0 0.0
    %1006 = vmatpush1.msra.mxu0 0.0
    %1007 = vmatprep.subr.mxu0 0.0
    %1008 = vmatpush1.msra.mxu0 0.0
    %1009 = vmatprep.mubr.f32.mxu0 0.0
    %v1010 = vand.u32 %v570, 4294901760
    %1011 = vmatmul.mubr.f32.gmra.mrb[0].mxu0 %v1010
    %v1012 = vpop.f32.mrb[0].mxu0
    %v1013 = vadd.f32 %v922, %v1012
    %v1014 = vpop.f32.mrb[0].mxu0
    %1015 = vmatprep.mubr.f32.mxu0 0.0
    %v1016 = vand.u32 %v573, 4294901760
    %1017 = vmatmul.mubr.f32.gmra.mrb[0].mxu0 %v1016
    %v1018 = vpop.f32.mrb[0].mxu0
    %v1019 = vadd.f32 %v930, %v1018
    %v1020 = vpop.f32.mrb[0].mxu0
    %1021 = vdwg.mxu0
    %1022 = vmatprep.subr.mxu0 0.0
    %v1023 = vand.u32 %v29, 4294901760
    %1024 = vmatpush1.msra.mxu0 %v1023
    %1025 = vmatprep.subr.mxu0 0.0
    %v1026 = vand.u32 %v30, 4294901760
    %1027 = vmatpush1.msra.mxu0 %v1026
    %1028 = vmatprep.subr.mxu0 0.0
    %v1029 = vand.u32 %v31, 4294901760
    %1030 = vmatpush1.msra.mxu0 %v1029
    %1031 = vmatprep.subr.mxu0 0.0
    %v1032 = vand.u32 %v32, 4294901760
    %1033 = vmatpush1.msra.mxu0 %v1032
    %1034 = vmatprep.subr.mxu0 0.0
    %1035 = vmatpush1.msra.mxu0 0.0
    %1036 = vmatprep.subr.mxu0 0.0
    %1037 = vmatpush1.msra.mxu0 0.0
    %1038 = vmatprep.subr.mxu0 0.0
    %1039 = vmatpush1.msra.mxu0 0.0
    %1040 = vmatprep.subr.mxu0 0.0
    %1041 = vmatpush1.msra.mxu0 0.0
    %1042 = vmatprep.subr.mxu0 0.0
    %1043 = vmatpush1.msra.mxu0 0.0
    %1044 = vmatprep.subr.mxu0 0.0
    %1045 = vmatpush1.msra.mxu0 0.0
    %1046 = vmatprep.subr.mxu0 0.0
    %1047 = vmatpush1.msra.mxu0 0.0
    %1048 = vmatprep.subr.mxu0 0.0
    %1049 = vmatpush1.msra.mxu0 0.0
    %1050 = vmatprep.subr.mxu0 0.0
    %1051 = vmatpush1.msra.mxu0 0.0
    %1052 = vmatprep.subr.mxu0 0.0
    %1053 = vmatpush1.msra.mxu0 0.0
    %1054 = vmatprep.subr.mxu0 0.0
    %1055 = vmatpush1.msra.mxu0 0.0
    %1056 = vmatprep.subr.mxu0 0.0
    %1057 = vmatpush1.msra.mxu0 0.0
    %1058 = vmatprep.subr.mxu0 0.0
    %1059 = vmatpush1.msra.mxu0 0.0
    %1060 = vmatprep.subr.mxu0 0.0
    %1061 = vmatpush1.msra.mxu0 0.0
    %1062 = vmatprep.subr.mxu0 0.0
    %1063 = vmatpush1.msra.mxu0 0.0
    %1064 = vmatprep.subr.mxu0 0.0
    %1065 = vmatpush1.msra.mxu0 0.0
    %1066 = vmatprep.subr.mxu0 0.0
    %1067 = vmatpush1.msra.mxu0 0.0
    %1068 = vmatprep.subr.mxu0 0.0
    %1069 = vmatpush1.msra.mxu0 0.0
    %1070 = vmatprep.subr.mxu0 0.0
    %1071 = vmatpush1.msra.mxu0 0.0
    %1072 = vmatprep.subr.mxu0 0.0
    %1073 = vmatpush1.msra.mxu0 0.0
    %1074 = vmatprep.subr.mxu0 0.0
    %1075 = vmatpush1.msra.mxu0 0.0
    %1076 = vmatprep.subr.mxu0 0.0
    %1077 = vmatpush1.msra.mxu0 0.0
    %1078 = vmatprep.subr.mxu0 0.0
    %1079 = vmatpush1.msra.mxu0 0.0
    %1080 = vmatprep.subr.mxu0 0.0
    %1081 = vmatpush1.msra.mxu0 0.0
    %1082 = vmatprep.subr.mxu0 0.0
    %1083 = vmatpush1.msra.mxu0 0.0
    %1084 = vmatprep.subr.mxu0 0.0
    %1085 = vmatpush1.msra.mxu0 0.0
    %1086 = vmatprep.subr.mxu0 0.0
    %1087 = vmatpush1.msra.mxu0 0.0
    %1088 = vmatprep.subr.mxu0 0.0
    %1089 = vmatpush1.msra.mxu0 0.0
    %1090 = vmatprep.mubr.f32.mxu0 0.0
    %v1091 = vand.u32 %v570, 4294901760
    %1092 = vmatmul.mubr.f32.gmra.mrb[0].mxu0 %v1091
    %v1093 = vpop.f32.mrb[0].mxu0
    %v1094 = vadd.f32 %v1013, %v1093
    %v1095 = vpop.f32.mrb[0].mxu0
    %1096 = vmatprep.mubr.f32.mxu0 0.0
    %v1097 = vand.u32 %v573, 4294901760
    %1098 = vmatmul.mubr.f32.gmra.mrb[0].mxu0 %v1097
    %v1099 = vpop.f32.mrb[0].mxu0
    %v1100 = vadd.f32 %v1019, %v1099
    %v1101 = vpop.f32.mrb[0].mxu0
    %1102 = vdwg.mxu0
    %vm1103 = vcmask 7168
    %v1104 = vsel %vm1103, %v23, 0.0
    %v1105 = vrot.slane %v1104, 4
    %v1106 = vadd.f32 %v1104, %v1105
    %v1107 = vrot.slane %v1106, 2
    %v1108 = vadd.f32 %v1106, %v1107
    %v1109 = vrot.slane %v1108, 1
    %v1110 = vadd.f32 %v1108, %v1109
    %v1111 = vsel %vm1103, %v24, 0.0
    %v1112 = vrot.slane %v1111, 4
    %v1113 = vadd.f32 %v1111, %v1112
    %v1114 = vrot.slane %v1113, 2
    %v1115 = vadd.f32 %v1113, %v1114
    %v1116 = vrot.slane %v1115, 1
    %v1117 = vadd.f32 %v1115, %v1116
    %1119 = vset.pattern.permute.xlu0 0
    %1120 = vperm.xlu0 %1119, %v23
    %v1121 = vpop.permute.xlu0 %1120
    %1124 = vset.pattern.permute.xlu0 0
    %1125 = vperm.xlu0 %1124, %v24
    %v1126 = vpop.permute.xlu0 %1125
    %v1128 = vmul.f32 %v1121, %v1094
    %v1129 = vmul.f32 %v1126, %v1100
    %vm1130 = vcmask 31744
    %v1131 = vsel %vm1130, %v1128, 0.0
    %v1132 = vrot.slane %v1131, 4
    %v1133 = vadd.f32 %v1131, %v1132
    %v1134 = vrot.slane %v1133, 2
    %v1135 = vadd.f32 %v1133, %v1134
    %v1136 = vrot.slane %v1135, 1
    %v1137 = vadd.f32 %v1135, %v1136
    %v1138 = vsel %vm1130, %v1129, 0.0
    %v1139 = vrot.slane %v1138, 4
    %v1140 = vadd.f32 %v1138, %v1139
    %v1141 = vrot.slane %v1140, 2
    %v1142 = vadd.f32 %v1140, %v1141
    %v1143 = vrot.slane %v1142, 1
    %v1144 = vadd.f32 %v1142, %v1143
    %1146 = vset.pattern.permute.xlu0 0
    %1147 = vperm.xlu0 %1146, %v1110
    %v1148 = vpop.permute.xlu0 %1147
    %1151 = vset.pattern.permute.xlu0 0
    %1152 = vperm.xlu0 %1151, %v1117
    %v1153 = vpop.permute.xlu0 %1152
    %v1155 = vrcp.pop %v1148
    %v1156 = vmul.f32 %v1137, %v1155
    %v1157 = vrcp.pop %v1153
    %v1158 = vmul.f32 %v1144, %v1157
    %1161 = vrot.lane.b32.xlu0 %v1094, 124
    %v1162 = vpop.permute.xlu0 %1161
    %1163 = vrot.lane.b32.xlu0 %v1100, 124
    %v1164 = vpop.permute.xlu0 %1163
    %v1167 = vadd.f32 %v1156, %v1162
    %v1168 = vadd.f32 %v1158, %v1164
    %vm1169 = vcmp.gt.f32.partialorder %v1167, 0.0
    %vm1170 = vcmp.gt.f32.partialorder %v1168, 0.0
    %v1171 = vmul.f32 %v1167, 0.2
    %v1172 = vmul.f32 %v1168, 0.2
    %v1173 = vsel %vm1169, %v1167, %v1171
    %v1174 = vsel %vm1170, %v1168, %v1172
    %vm1175 = vcmp.gt.f32.partialorder %v23, 0.0
    %vm1176 = vcmp.gt.f32.partialorder %v24, 0.0
    %v1177 = vsel %vm1175, 1, 0
    %v1178 = vsel %vm1176, 1, 0
    %1179 = vset.pattern.permute.xlu0 1
    %1180 = vperm.xlu0 %1179, %v1177
    %v1181 = vpop.permute.xlu0 %1180
    %1182 = vset.pattern.permute.xlu0 1
    %1183 = vperm.xlu0 %1182, %v1178
    %v1184 = vpop.permute.xlu0 %1183
    %vm1185 = vcmp.eq.s32.totalorder %v1181, 1
    %vm1186 = vcmp.eq.s32.totalorder %v1184, 1
    %v1187 = vsel %vm1185, %v1173, -9e+15
    %v1188 = vsel %vm1186, %v1174, -9e+15
    %v1189 = vsel %vm1130, %v1187, -inf
    %v1190 = vrot.slane %v1189, 4
    %v1191 = vmax.f32 %v1189, %v1190
    %v1192 = vrot.slane %v1191, 2
    %v1193 = vmax.f32 %v1191, %v1192
    %v1194 = vrot.slane %v1193, 1
    %v1195 = vmax.f32 %v1193, %v1194
    %v1196 = vsel %vm1130, %v1188, -inf
    %v1197 = vrot.slane %v1196, 4
    %v1198 = vmax.f32 %v1196, %v1197
    %v1199 = vrot.slane %v1198, 2
    %v1200 = vmax.f32 %v1198, %v1199
    %v1201 = vrot.slane %v1200, 1
    %v1202 = vmax.f32 %v1200, %v1201
    %v1203 = vsub.f32 %v1187, %v1195
    %v1204 = vsub.f32 %v1188, %v1202
    %v1205 = vmul.f32 %v1203, 1.442695
    %v1206 = vpow.pop %v1205
    %v1207 = vmul.f32 %v1204, 1.442695
    %v1208 = vpow.pop %v1207
    %v1209 = vsel %vm1130, %v1206, 0.0
    %v1210 = vrot.slane %v1209, 4
    %v1211 = vadd.f32 %v1209, %v1210
    %v1212 = vrot.slane %v1211, 2
    %v1213 = vadd.f32 %v1211, %v1212
    %v1214 = vrot.slane %v1213, 1
    %v1215 = vadd.f32 %v1213, %v1214
    %v1216 = vsel %vm1130, %v1208, 0.0
    %v1217 = vrot.slane %v1216, 4
    %v1218 = vadd.f32 %v1216, %v1217
    %v1219 = vrot.slane %v1218, 2
    %v1220 = vadd.f32 %v1218, %v1219
    %v1221 = vrot.slane %v1220, 1
    %v1222 = vadd.f32 %v1220, %v1221
    %v1223 = vrcp.pop %v1215
    %v1224 = vmul.f32 %v1206, %v1223
    %v1225 = vrcp.pop %v1222
    %v1226 = vmul.f32 %v1208, %v1225
    %1227 = vxpose.xlu0.b32.start [1/16] %v1224, 128
    %1228 = vxpose.xlu0.b32.cont [2/16] 0.0, 128
    %1229 = vxpose.xlu0.b32.cont [3/16] 0.0, 128
    %1230 = vxpose.xlu0.b32.cont [4/16] 0.0, 128
    %1231 = vxpose.xlu0.b32.cont [5/16] 0.0, 128
    %1232 = vxpose.xlu0.b32.cont [6/16] 0.0, 128
    %1233 = vxpose.xlu0.b32.cont [7/16] 0.0, 128
    %1234 = vxpose.xlu0.b32.cont [8/16] 0.0, 128
    %1235 = vxpose.xlu0.b32.cont [9/16] 0.0, 128
    %1236 = vxpose.xlu0.b32.cont [10/16] 0.0, 128
    %1237 = vxpose.xlu0.b32.cont [11/16] 0.0, 128
    %1238 = vxpose.xlu0.b32.cont [12/16] 0.0, 128
    %1239 = vxpose.xlu0.b32.cont [13/16] 0.0, 128
    %1240 = vxpose.xlu0.b32.cont [14/16] 0.0, 128
    %1241 = vxpose.xlu0.b32.cont [15/16] 0.0, 128
    %1242 = vxpose.xlu0.b32.end [16/16] 0.0, 128
    %v1243 = vpop.trf.xlu0
    %v1244 = vpop.trf.xlu0
    %v1245 = vpop.trf.xlu0
    %v1246 = vpop.trf.xlu0
    %v1247 = vpop.trf.xlu0
    %v1248 = vpop.trf.xlu0
    %v1249 = vpop.trf.xlu0
    %v1250 = vpop.trf.xlu0
    %v1251 = vpop.trf.xlu0
    %v1252 = vpop.trf.xlu0
    %v1253 = vpop.trf.xlu0
    %v1254 = vpop.trf.xlu0
    %v1255 = vpop.trf.xlu0
    %v1256 = vpop.trf.xlu0
    %v1257 = vpop.trf.xlu0
    %v1258 = vpop.trf.xlu0
    %vm1259 = vcmask 64512
    %v1261 = vsel %vm1259, %v1243, 0
    %1263 = vmatprep.subr.mxu0 0.0
    %v1264 = vand.u32 %v560, 4294901760
    %1265 = vmatpush1.msra.mxu0 %v1264
    %1266 = vmatprep.subr.mxu0 0.0
    %1267 = vmatpush1.msra.mxu0 0.0
    %1268 = vmatprep.subr.mxu0 0.0
    %1269 = vmatpush1.msra.mxu0 0.0
    %1270 = vmatprep.subr.mxu0 0.0
    %1271 = vmatpush1.msra.mxu0 0.0
    %1272 = vmatprep.subr.mxu0 0.0
    %1273 = vmatpush1.msra.mxu0 0.0
    %1274 = vmatprep.subr.mxu0 0.0
    %1275 = vmatpush1.msra.mxu0 0.0
    %1276 = vmatprep.subr.mxu0 0.0
    %1277 = vmatpush1.msra.mxu0 0.0
    %1278 = vmatprep.subr.mxu0 0.0
    %1279 = vmatpush1.msra.mxu0 0.0
    %1280 = vmatprep.subr.mxu0 0.0
    %1281 = vmatpush1.msra.mxu0 0.0
    %1282 = vmatprep.subr.mxu0 0.0
    %1283 = vmatpush1.msra.mxu0 0.0
    %1284 = vmatprep.subr.mxu0 0.0
    %1285 = vmatpush1.msra.mxu0 0.0
    %1286 = vmatprep.subr.mxu0 0.0
    %1287 = vmatpush1.msra.mxu0 0.0
    %1288 = vmatprep.subr.mxu0 0.0
    %1289 = vmatpush1.msra.mxu0 0.0
    %1290 = vmatprep.subr.mxu0 0.0
    %1291 = vmatpush1.msra.mxu0 0.0
    %1292 = vmatprep.subr.mxu0 0.0
    %1293 = vmatpush1.msra.mxu0 0.0
    %1294 = vmatprep.subr.mxu0 0.0
    %1295 = vmatpush1.msra.mxu0 0.0
    %1296 = vmatprep.subr.mxu0 0.0
    %1297 = vmatpush1.msra.mxu0 0.0
    %1298 = vmatprep.subr.mxu0 0.0
    %1299 = vmatpush1.msra.mxu0 0.0
    %1300 = vmatprep.subr.mxu0 0.0
    %1301 = vmatpush1.msra.mxu0 0.0
    %1302 = vmatprep.subr.mxu0 0.0
    %1303 = vmatpush1.msra.mxu0 0.0
    %1304 = vmatprep.subr.mxu0 0.0
    %1305 = vmatpush1.msra.mxu0 0.0
    %1306 = vmatprep.subr.mxu0 0.0
    %1307 = vmatpush1.msra.mxu0 0.0
    %1308 = vmatprep.subr.mxu0 0.0
    %1309 = vmatpush1.msra.mxu0 0.0
    %1310 = vmatprep.subr.mxu0 0.0
    %1311 = vmatpush1.msra.mxu0 0.0
    %1312 = vmatprep.subr.mxu0 0.0
    %1313 = vmatpush1.msra.mxu0 0.0
    %1314 = vmatprep.subr.mxu0 0.0
    %1315 = vmatpush1.msra.mxu0 0.0
    %1316 = vmatprep.subr.mxu0 0.0
    %1317 = vmatpush1.msra.mxu0 0.0
    %1318 = vmatprep.subr.mxu0 0.0
    %1319 = vmatpush1.msra.mxu0 0.0
    %1320 = vmatprep.subr.mxu0 0.0
    %1321 = vmatpush1.msra.mxu0 0.0
    %1322 = vmatprep.subr.mxu0 0.0
    %1323 = vmatpush1.msra.mxu0 0.0
    %1324 = vmatprep.subr.mxu0 0.0
    %1325 = vmatpush1.msra.mxu0 0.0
    %1326 = vmatprep.subr.mxu0 0.0
    %1327 = vmatpush1.msra.mxu0 0.0
    %1328 = vmatprep.mubr.f32.mxu0 0.0
    %v1329 = vand.u32 %v1261, 4294901760
    %v1330 = vsub.f32 %v1261, %v1329
    %v1331 = vand.u32 %v1330, 4294901760
    %v1332 = vsub.f32 %v1330, %v1331
    %v1333 = vand.u32 %v1332, 4294901760
    %1334 = vmatmul.mubr.f32.gmra.mrb[0].mxu0 %v1333
    %v1335 = vpop.f32.mrb[0].mxu0
    %v1336 = vadd.f32 0.0, %v1335
    %v1337 = vpop.f32.mrb[0].mxu0
    %1338 = vdwg.mxu0
    %1339 = vmatprep.subr.mxu0 0.0
    %v1340 = vand.u32 %v560, 4294901760
    %v1341 = vsub.f32 %v560, %v1340
    %v1342 = vand.u32 %v1341, 4294901760
    %v1343 = vsub.f32 %v1341, %v1342
    %v1344 = vand.u32 %v1343, 4294901760
    %1345 = vmatpush1.msra.mxu0 %v1344
    %1346 = vmatprep.subr.mxu0 0.0
    %1347 = vmatpush1.msra.mxu0 0.0
    %1348 = vmatprep.subr.mxu0 0.0
    %1349 = vmatpush1.msra.mxu0 0.0
    %1350 = vmatprep.subr.mxu0 0.0
    %1351 = vmatpush1.msra.mxu0 0.0
    %1352 = vmatprep.subr.mxu0 0.0
    %1353 = vmatpush1.msra.mxu0 0.0
    %1354 = vmatprep.subr.mxu0 0.0
    %1355 = vmatpush1.msra.mxu0 0.0
    %1356 = vmatprep.subr.mxu0 0.0
    %1357 = vmatpush1.msra.mxu0 0.0
    %1358 = vmatprep.subr.mxu0 0.0
    %1359 = vmatpush1.msra.mxu0 0.0
    %1360 = vmatprep.subr.mxu0 0.0
    %1361 = vmatpush1.msra.mxu0 0.0
    %1362 = vmatprep.subr.mxu0 0.0
    %1363 = vmatpush1.msra.mxu0 0.0
    %1364 = vmatprep.subr.mxu0 0.0
    %1365 = vmatpush1.msra.mxu0 0.0
    %1366 = vmatprep.subr.mxu0 0.0
    %1367 = vmatpush1.msra.mxu0 0.0
    %1368 = vmatprep.subr.mxu0 0.0
    %1369 = vmatpush1.msra.mxu0 0.0
    %1370 = vmatprep.subr.mxu0 0.0
    %1371 = vmatpush1.msra.mxu0 0.0
    %1372 = vmatprep.subr.mxu0 0.0
    %1373 = vmatpush1.msra.mxu0 0.0
    %1374 = vmatprep.subr.mxu0 0.0
    %1375 = vmatpush1.msra.mxu0 0.0
    %1376 = vmatprep.subr.mxu0 0.0
    %1377 = vmatpush1.msra.mxu0 0.0
    %1378 = vmatprep.subr.mxu0 0.0
    %1379 = vmatpush1.msra.mxu0 0.0
    %1380 = vmatprep.subr.mxu0 0.0
    %1381 = vmatpush1.msra.mxu0 0.0
    %1382 = vmatprep.subr.mxu0 0.0
    %1383 = vmatpush1.msra.mxu0 0.0
    %1384 = vmatprep.subr.mxu0 0.0
    %1385 = vmatpush1.msra.mxu0 0.0
    %1386 = vmatprep.subr.mxu0 0.0
    %1387 = vmatpush1.msra.mxu0 0.0
    %1388 = vmatprep.subr.mxu0 0.0
    %1389 = vmatpush1.msra.mxu0 0.0
    %1390 = vmatprep.subr.mxu0 0.0
    %1391 = vmatpush1.msra.mxu0 0.0
    %1392 = vmatprep.subr.mxu0 0.0
    %1393 = vmatpush1.msra.mxu0 0.0
    %1394 = vmatprep.subr.mxu0 0.0
    %1395 = vmatpush1.msra.mxu0 0.0
    %1396 = vmatprep.subr.mxu0 0.0
    %1397 = vmatpush1.msra.mxu0 0.0
    %1398 = vmatprep.subr.mxu0 0.0
    %1399 = vmatpush1.msra.mxu0 0.0
    %1400 = vmatprep.subr.mxu0 0.0
    %1401 = vmatpush1.msra.mxu0 0.0
    %1402 = vmatprep.subr.mxu0 0.0
    %1403 = vmatpush1.msra.mxu0 0.0
    %1404 = vmatprep.subr.mxu0 0.0
    %1405 = vmatpush1.msra.mxu0 0.0
    %1406 = vmatprep.subr.mxu0 0.0
    %1407 = vmatpush1.msra.mxu0 0.0
    %1408 = vmatprep.mubr.f32.mxu0 0.0
    %v1409 = vand.u32 %v1261, 4294901760
    %1410 = vmatmul.mubr.f32.gmra.mrb[0].mxu0 %v1409
    %v1411 = vpop.f32.mrb[0].mxu0
    %v1412 = vadd.f32 %v1336, %v1411
    %v1413 = vpop.f32.mrb[0].mxu0
    %1414 = vdwg.mxu0
    %1415 = vmatprep.subr.mxu0 0.0
    %v1416 = vand.u32 %v560, 4294901760
    %v1417 = vsub.f32 %v560, %v1416
    %1418 = vmatpush1.msra.mxu0 %v1417
    %1419 = vmatprep.subr.mxu0 0.0
    %1420 = vmatpush1.msra.mxu0 0.0
    %1421 = vmatprep.subr.mxu0 0.0
    %1422 = vmatpush1.msra.mxu0 0.0
    %1423 = vmatprep.subr.mxu0 0.0
    %1424 = vmatpush1.msra.mxu0 0.0
    %1425 = vmatprep.subr.mxu0 0.0
    %1426 = vmatpush1.msra.mxu0 0.0
    %1427 = vmatprep.subr.mxu0 0.0
    %1428 = vmatpush1.msra.mxu0 0.0
    %1429 = vmatprep.subr.mxu0 0.0
    %1430 = vmatpush1.msra.mxu0 0.0
    %1431 = vmatprep.subr.mxu0 0.0
    %1432 = vmatpush1.msra.mxu0 0.0
    %1433 = vmatprep.subr.mxu0 0.0
    %1434 = vmatpush1.msra.mxu0 0.0
    %1435 = vmatprep.subr.mxu0 0.0
    %1436 = vmatpush1.msra.mxu0 0.0
    %1437 = vmatprep.subr.mxu0 0.0
    %1438 = vmatpush1.msra.mxu0 0.0
    %1439 = vmatprep.subr.mxu0 0.0
    %1440 = vmatpush1.msra.mxu0 0.0
    %1441 = vmatprep.subr.mxu0 0.0
    %1442 = vmatpush1.msra.mxu0 0.0
    %1443 = vmatprep.subr.mxu0 0.0
    %1444 = vmatpush1.msra.mxu0 0.0
    %1445 = vmatprep.subr.mxu0 0.0
    %1446 = vmatpush1.msra.mxu0 0.0
    %1447 = vmatprep.subr.mxu0 0.0
    %1448 = vmatpush1.msra.mxu0 0.0
    %1449 = vmatprep.subr.mxu0 0.0
    %1450 = vmatpush1.msra.mxu0 0.0
    %1451 = vmatprep.subr.mxu0 0.0
    %1452 = vmatpush1.msra.mxu0 0.0
    %1453 = vmatprep.subr.mxu0 0.0
    %1454 = vmatpush1.msra.mxu0 0.0
    %1455 = vmatprep.subr.mxu0 0.0
    %1456 = vmatpush1.msra.mxu0 0.0
    %1457 = vmatprep.subr.mxu0 0.0
    %1458 = vmatpush1.msra.mxu0 0.0
    %1459 = vmatprep.subr.mxu0 0.0
    %1460 = vmatpush1.msra.mxu0 0.0
    %1461 = vmatprep.subr.mxu0 0.0
    %1462 = vmatpush1.msra.mxu0 0.0
    %1463 = vmatprep.subr.mxu0 0.0
    %1464 = vmatpush1.msra.mxu0 0.0
    %1465 = vmatprep.subr.mxu0 0.0
    %1466 = vmatpush1.msra.mxu0 0.0
    %1467 = vmatprep.subr.mxu0 0.0
    %1468 = vmatpush1.msra.mxu0 0.0
    %1469 = vmatprep.subr.mxu0 0.0
    %1470 = vmatpush1.msra.mxu0 0.0
    %1471 = vmatprep.subr.mxu0 0.0
    %1472 = vmatpush1.msra.mxu0 0.0
    %1473 = vmatprep.subr.mxu0 0.0
    %1474 = vmatpush1.msra.mxu0 0.0
    %1475 = vmatprep.subr.mxu0 0.0
    %1476 = vmatpush1.msra.mxu0 0.0
    %1477 = vmatprep.subr.mxu0 0.0
    %1478 = vmatpush1.msra.mxu0 0.0
    %1479 = vmatprep.subr.mxu0 0.0
    %1480 = vmatpush1.msra.mxu0 0.0
    %1481 = vmatprep.mubr.f32.mxu0 0.0
    %v1482 = vand.u32 %v1261, 4294901760
    %v1483 = vsub.f32 %v1261, %v1482
    %1484 = vmatmul.mubr.f32.gmra.mrb[0].mxu0 %v1483
    %v1485 = vpop.f32.mrb[0].mxu0
    %v1486 = vadd.f32 %v1412, %v1485
    %v1487 = vpop.f32.mrb[0].mxu0
    %1488 = vdwg.mxu0
    %1489 = vmatprep.subr.mxu0 0.0
    %v1490 = vand.u32 %v560, 4294901760
    %1491 = vmatpush1.msra.mxu0 %v1490
    %1492 = vmatprep.subr.mxu0 0.0
    %1493 = vmatpush1.msra.mxu0 0.0
    %1494 = vmatprep.subr.mxu0 0.0
    %1495 = vmatpush1.msra.mxu0 0.0
    %1496 = vmatprep.subr.mxu0 0.0
    %1497 = vmatpush1.msra.mxu0 0.0
    %1498 = vmatprep.subr.mxu0 0.0
    %1499 = vmatpush1.msra.mxu0 0.0
    %1500 = vmatprep.subr.mxu0 0.0
    %1501 = vmatpush1.msra.mxu0 0.0
    %1502 = vmatprep.subr.mxu0 0.0
    %1503 = vmatpush1.msra.mxu0 0.0
    %1504 = vmatprep.subr.mxu0 0.0
    %1505 = vmatpush1.msra.mxu0 0.0
    %1506 = vmatprep.subr.mxu0 0.0
    %1507 = vmatpush1.msra.mxu0 0.0
    %1508 = vmatprep.subr.mxu0 0.0
    %1509 = vmatpush1.msra.mxu0 0.0
    %1510 = vmatprep.subr.mxu0 0.0
    %1511 = vmatpush1.msra.mxu0 0.0
    %1512 = vmatprep.subr.mxu0 0.0
    %1513 = vmatpush1.msra.mxu0 0.0
    %1514 = vmatprep.subr.mxu0 0.0
    %1515 = vmatpush1.msra.mxu0 0.0
    %1516 = vmatprep.subr.mxu0 0.0
    %1517 = vmatpush1.msra.mxu0 0.0
    %1518 = vmatprep.subr.mxu0 0.0
    %1519 = vmatpush1.msra.mxu0 0.0
    %1520 = vmatprep.subr.mxu0 0.0
    %1521 = vmatpush1.msra.mxu0 0.0
    %1522 = vmatprep.subr.mxu0 0.0
    %1523 = vmatpush1.msra.mxu0 0.0
    %1524 = vmatprep.subr.mxu0 0.0
    %1525 = vmatpush1.msra.mxu0 0.0
    %1526 = vmatprep.subr.mxu0 0.0
    %1527 = vmatpush1.msra.mxu0 0.0
    %1528 = vmatprep.subr.mxu0 0.0
    %1529 = vmatpush1.msra.mxu0 0.0
    %1530 = vmatprep.subr.mxu0 0.0
    %1531 = vmatpush1.msra.mxu0 0.0
    %1532 = vmatprep.subr.mxu0 0.0
    %1533 = vmatpush1.msra.mxu0 0.0
    %1534 = vmatprep.subr.mxu0 0.0
    %1535 = vmatpush1.msra.mxu0 0.0
    %1536 = vmatprep.subr.mxu0 0.0
    %1537 = vmatpush1.msra.mxu0 0.0
    %1538 = vmatprep.subr.mxu0 0.0
    %1539 = vmatpush1.msra.mxu0 0.0
    %1540 = vmatprep.subr.mxu0 0.0
    %1541 = vmatpush1.msra.mxu0 0.0
    %1542 = vmatprep.subr.mxu0 0.0
    %1543 = vmatpush1.msra.mxu0 0.0
    %1544 = vmatprep.subr.mxu0 0.0
    %1545 = vmatpush1.msra.mxu0 0.0
    %1546 = vmatprep.subr.mxu0 0.0
    %1547 = vmatpush1.msra.mxu0 0.0
    %1548 = vmatprep.subr.mxu0 0.0
    %1549 = vmatpush1.msra.mxu0 0.0
    %1550 = vmatprep.subr.mxu0 0.0
    %1551 = vmatpush1.msra.mxu0 0.0
    %1552 = vmatprep.subr.mxu0 0.0
    %1553 = vmatpush1.msra.mxu0 0.0
    %1554 = vmatprep.mubr.f32.mxu0 0.0
    %v1555 = vand.u32 %v1261, 4294901760
    %v1556 = vsub.f32 %v1261, %v1555
    %v1557 = vand.u32 %v1556, 4294901760
    %1558 = vmatmul.mubr.f32.gmra.mrb[0].mxu0 %v1557
    %v1559 = vpop.f32.mrb[0].mxu0
    %v1560 = vadd.f32 %v1486, %v1559
    %v1561 = vpop.f32.mrb[0].mxu0
    %1562 = vdwg.mxu0
    %1563 = vmatprep.subr.mxu0 0.0
    %v1564 = vand.u32 %v560, 4294901760
    %v1565 = vsub.f32 %v560, %v1564
    %v1566 = vand.u32 %v1565, 4294901760
    %1567 = vmatpush1.msra.mxu0 %v1566
    %1568 = vmatprep.subr.mxu0 0.0
    %1569 = vmatpush1.msra.mxu0 0.0
    %1570 = vmatprep.subr.mxu0 0.0
    %1571 = vmatpush1.msra.mxu0 0.0
    %1572 = vmatprep.subr.mxu0 0.0
    %1573 = vmatpush1.msra.mxu0 0.0
    %1574 = vmatprep.subr.mxu0 0.0
    %1575 = vmatpush1.msra.mxu0 0.0
    %1576 = vmatprep.subr.mxu0 0.0
    %1577 = vmatpush1.msra.mxu0 0.0
    %1578 = vmatprep.subr.mxu0 0.0
    %1579 = vmatpush1.msra.mxu0 0.0
    %1580 = vmatprep.subr.mxu0 0.0
    %1581 = vmatpush1.msra.mxu0 0.0
    %1582 = vmatprep.subr.mxu0 0.0
    %1583 = vmatpush1.msra.mxu0 0.0
    %1584 = vmatprep.subr.mxu0 0.0
    %1585 = vmatpush1.msra.mxu0 0.0
    %1586 = vmatprep.subr.mxu0 0.0
    %1587 = vmatpush1.msra.mxu0 0.0
    %1588 = vmatprep.subr.mxu0 0.0
    %1589 = vmatpush1.msra.mxu0 0.0
    %1590 = vmatprep.subr.mxu0 0.0
    %1591 = vmatpush1.msra.mxu0 0.0
    %1592 = vmatprep.subr.mxu0 0.0
    %1593 = vmatpush1.msra.mxu0 0.0
    %1594 = vmatprep.subr.mxu0 0.0
    %1595 = vmatpush1.msra.mxu0 0.0
    %1596 = vmatprep.subr.mxu0 0.0
    %1597 = vmatpush1.msra.mxu0 0.0
    %1598 = vmatprep.subr.mxu0 0.0
    %1599 = vmatpush1.msra.mxu0 0.0
    %1600 = vmatprep.subr.mxu0 0.0
    %1601 = vmatpush1.msra.mxu0 0.0
    %1602 = vmatprep.subr.mxu0 0.0
    %1603 = vmatpush1.msra.mxu0 0.0
    %1604 = vmatprep.subr.mxu0 0.0
    %1605 = vmatpush1.msra.mxu0 0.0
    %1606 = vmatprep.subr.mxu0 0.0
    %1607 = vmatpush1.msra.mxu0 0.0
    %1608 = vmatprep.subr.mxu0 0.0
    %1609 = vmatpush1.msra.mxu0 0.0
    %1610 = vmatprep.subr.mxu0 0.0
    %1611 = vmatpush1.msra.mxu0 0.0
    %1612 = vmatprep.subr.mxu0 0.0
    %1613 = vmatpush1.msra.mxu0 0.0
    %1614 = vmatprep.subr.mxu0 0.0
    %1615 = vmatpush1.msra.mxu0 0.0
    %1616 = vmatprep.subr.mxu0 0.0
    %1617 = vmatpush1.msra.mxu0 0.0
    %1618 = vmatprep.subr.mxu0 0.0
    %1619 = vmatpush1.msra.mxu0 0.0
    %1620 = vmatprep.subr.mxu0 0.0
    %1621 = vmatpush1.msra.mxu0 0.0
    %1622 = vmatprep.subr.mxu0 0.0
    %1623 = vmatpush1.msra.mxu0 0.0
    %1624 = vmatprep.subr.mxu0 0.0
    %1625 = vmatpush1.msra.mxu0 0.0
    %1626 = vmatprep.subr.mxu0 0.0
    %1627 = vmatpush1.msra.mxu0 0.0
    %1628 = vmatprep.subr.mxu0 0.0
    %1629 = vmatpush1.msra.mxu0 0.0
    %1630 = vmatprep.mubr.f32.mxu0 0.0
    %v1631 = vand.u32 %v1261, 4294901760
    %1632 = vmatmul.mubr.f32.gmra.mrb[0].mxu0 %v1631
    %v1633 = vpop.f32.mrb[0].mxu0
    %v1634 = vadd.f32 %v1560, %v1633
    %v1635 = vpop.f32.mrb[0].mxu0
    %1636 = vdwg.mxu0
    %1637 = vmatprep.subr.mxu0 0.0
    %v1638 = vand.u32 %v560, 4294901760
    %1639 = vmatpush1.msra.mxu0 %v1638
    %1640 = vmatprep.subr.mxu0 0.0
    %1641 = vmatpush1.msra.mxu0 0.0
    %1642 = vmatprep.subr.mxu0 0.0
    %1643 = vmatpush1.msra.mxu0 0.0
    %1644 = vmatprep.subr.mxu0 0.0
    %1645 = vmatpush1.msra.mxu0 0.0
    %1646 = vmatprep.subr.mxu0 0.0
    %1647 = vmatpush1.msra.mxu0 0.0
    %1648 = vmatprep.subr.mxu0 0.0
    %1649 = vmatpush1.msra.mxu0 0.0
    %1650 = vmatprep.subr.mxu0 0.0
    %1651 = vmatpush1.msra.mxu0 0.0
    %1652 = vmatprep.subr.mxu0 0.0
    %1653 = vmatpush1.msra.mxu0 0.0
    %1654 = vmatprep.subr.mxu0 0.0
    %1655 = vmatpush1.msra.mxu0 0.0
    %1656 = vmatprep.subr.mxu0 0.0
    %1657 = vmatpush1.msra.mxu0 0.0
    %1658 = vmatprep.subr.mxu0 0.0
    %1659 = vmatpush1.msra.mxu0 0.0
    %1660 = vmatprep.subr.mxu0 0.0
    %1661 = vmatpush1.msra.mxu0 0.0
    %1662 = vmatprep.subr.mxu0 0.0
    %1663 = vmatpush1.msra.mxu0 0.0
    %1664 = vmatprep.subr.mxu0 0.0
    %1665 = vmatpush1.msra.mxu0 0.0
    %1666 = vmatprep.subr.mxu0 0.0
    %1667 = vmatpush1.msra.mxu0 0.0
    %1668 = vmatprep.subr.mxu0 0.0
    %1669 = vmatpush1.msra.mxu0 0.0
    %1670 = vmatprep.subr.mxu0 0.0
    %1671 = vmatpush1.msra.mxu0 0.0
    %1672 = vmatprep.subr.mxu0 0.0
    %1673 = vmatpush1.msra.mxu0 0.0
    %1674 = vmatprep.subr.mxu0 0.0
    %1675 = vmatpush1.msra.mxu0 0.0
    %1676 = vmatprep.subr.mxu0 0.0
    %1677 = vmatpush1.msra.mxu0 0.0
    %1678 = vmatprep.subr.mxu0 0.0
    %1679 = vmatpush1.msra.mxu0 0.0
    %1680 = vmatprep.subr.mxu0 0.0
    %1681 = vmatpush1.msra.mxu0 0.0
    %1682 = vmatprep.subr.mxu0 0.0
    %1683 = vmatpush1.msra.mxu0 0.0
    %1684 = vmatprep.subr.mxu0 0.0
    %1685 = vmatpush1.msra.mxu0 0.0
    %1686 = vmatprep.subr.mxu0 0.0
    %1687 = vmatpush1.msra.mxu0 0.0
    %1688 = vmatprep.subr.mxu0 0.0
    %1689 = vmatpush1.msra.mxu0 0.0
    %1690 = vmatprep.subr.mxu0 0.0
    %1691 = vmatpush1.msra.mxu0 0.0
    %1692 = vmatprep.subr.mxu0 0.0
    %1693 = vmatpush1.msra.mxu0 0.0
    %1694 = vmatprep.subr.mxu0 0.0
    %1695 = vmatpush1.msra.mxu0 0.0
    %1696 = vmatprep.subr.mxu0 0.0
    %1697 = vmatpush1.msra.mxu0 0.0
    %1698 = vmatprep.subr.mxu0 0.0
    %1699 = vmatpush1.msra.mxu0 0.0
    %1700 = vmatprep.subr.mxu0 0.0
    %1701 = vmatpush1.msra.mxu0 0.0
    %1702 = vmatprep.mubr.f32.mxu0 0.0
    %v1703 = vand.u32 %v1261, 4294901760
    %1704 = vmatmul.mubr.f32.gmra.mrb[0].mxu0 %v1703
    %v1705 = vpop.f32.mrb[0].mxu0
    %v1706 = vadd.f32 %v1634, %v1705
    %v1707 = vpop.f32.mrb[0].mxu0
    %1708 = vdwg.mxu0
    %1709 = vxpose.xlu0.b32.start [1/16] %v1226, 128
    %1710 = vxpose.xlu0.b32.cont [2/16] 0.0, 128
    %1711 = vxpose.xlu0.b32.cont [3/16] 0.0, 128
    %1712 = vxpose.xlu0.b32.cont [4/16] 0.0, 128
    %1713 = vxpose.xlu0.b32.cont [5/16] 0.0, 128
    %1714 = vxpose.xlu0.b32.cont [6/16] 0.0, 128
    %1715 = vxpose.xlu0.b32.cont [7/16] 0.0, 128
    %1716 = vxpose.xlu0.b32.cont [8/16] 0.0, 128
    %1717 = vxpose.xlu0.b32.cont [9/16] 0.0, 128
    %1718 = vxpose.xlu0.b32.cont [10/16] 0.0, 128
    %1719 = vxpose.xlu0.b32.cont [11/16] 0.0, 128
    %1720 = vxpose.xlu0.b32.cont [12/16] 0.0, 128
    %1721 = vxpose.xlu0.b32.cont [13/16] 0.0, 128
    %1722 = vxpose.xlu0.b32.cont [14/16] 0.0, 128
    %1723 = vxpose.xlu0.b32.cont [15/16] 0.0, 128
    %1724 = vxpose.xlu0.b32.end [16/16] 0.0, 128
    %v1725 = vpop.trf.xlu0
    %v1726 = vpop.trf.xlu0
    %v1727 = vpop.trf.xlu0
    %v1728 = vpop.trf.xlu0
    %v1729 = vpop.trf.xlu0
    %v1730 = vpop.trf.xlu0
    %v1731 = vpop.trf.xlu0
    %v1732 = vpop.trf.xlu0
    %v1733 = vpop.trf.xlu0
    %v1734 = vpop.trf.xlu0
    %v1735 = vpop.trf.xlu0
    %v1736 = vpop.trf.xlu0
    %v1737 = vpop.trf.xlu0
    %v1738 = vpop.trf.xlu0
    %v1739 = vpop.trf.xlu0
    %v1740 = vpop.trf.xlu0
    %v1742 = vsel %vm1259, %v1725, 0
    %1744 = vmatprep.subr.mxu0 0.0
    %v1745 = vand.u32 %v566, 4294901760
    %1746 = vmatpush1.msra.mxu0 %v1745
    %1747 = vmatprep.subr.mxu0 0.0
    %1748 = vmatpush1.msra.mxu0 0.0
    %1749 = vmatprep.subr.mxu0 0.0
    %1750 = vmatpush1.msra.mxu0 0.0
    %1751 = vmatprep.subr.mxu0 0.0
    %1752 = vmatpush1.msra.mxu0 0.0
    %1753 = vmatprep.subr.mxu0 0.0
    %1754 = vmatpush1.msra.mxu0 0.0
    %1755 = vmatprep.subr.mxu0 0.0
    %1756 = vmatpush1.msra.mxu0 0.0
    %1757 = vmatprep.subr.mxu0 0.0
    %1758 = vmatpush1.msra.mxu0 0.0
    %1759 = vmatprep.subr.mxu0 0.0
    %1760 = vmatpush1.msra.mxu0 0.0
    %1761 = vmatprep.subr.mxu0 0.0
    %1762 = vmatpush1.msra.mxu0 0.0
    %1763 = vmatprep.subr.mxu0 0.0
    %1764 = vmatpush1.msra.mxu0 0.0
    %1765 = vmatprep.subr.mxu0 0.0
    %1766 = vmatpush1.msra.mxu0 0.0
    %1767 = vmatprep.subr.mxu0 0.0
    %1768 = vmatpush1.msra.mxu0 0.0
    %1769 = vmatprep.subr.mxu0 0.0
    %1770 = vmatpush1.msra.mxu0 0.0
    %1771 = vmatprep.subr.mxu0 0.0
    %1772 = vmatpush1.msra.mxu0 0.0
    %1773 = vmatprep.subr.mxu0 0.0
    %1774 = vmatpush1.msra.mxu0 0.0
    %1775 = vmatprep.subr.mxu0 0.0
    %1776 = vmatpush1.msra.mxu0 0.0
    %1777 = vmatprep.subr.mxu0 0.0
    %1778 = vmatpush1.msra.mxu0 0.0
    %1779 = vmatprep.subr.mxu0 0.0
    %1780 = vmatpush1.msra.mxu0 0.0
    %1781 = vmatprep.subr.mxu0 0.0
    %1782 = vmatpush1.msra.mxu0 0.0
    %1783 = vmatprep.subr.mxu0 0.0
    %1784 = vmatpush1.msra.mxu0 0.0
    %1785 = vmatprep.subr.mxu0 0.0
    %1786 = vmatpush1.msra.mxu0 0.0
    %1787 = vmatprep.subr.mxu0 0.0
    %1788 = vmatpush1.msra.mxu0 0.0
    %1789 = vmatprep.subr.mxu0 0.0
    %1790 = vmatpush1.msra.mxu0 0.0
    %1791 = vmatprep.subr.mxu0 0.0
    %1792 = vmatpush1.msra.mxu0 0.0
    %1793 = vmatprep.subr.mxu0 0.0
    %1794 = vmatpush1.msra.mxu0 0.0
    %1795 = vmatprep.subr.mxu0 0.0
    %1796 = vmatpush1.msra.mxu0 0.0
    %1797 = vmatprep.subr.mxu0 0.0
    %1798 = vmatpush1.msra.mxu0 0.0
    %1799 = vmatprep.subr.mxu0 0.0
    %1800 = vmatpush1.msra.mxu0 0.0
    %1801 = vmatprep.subr.mxu0 0.0
    %1802 = vmatpush1.msra.mxu0 0.0
    %1803 = vmatprep.subr.mxu0 0.0
    %1804 = vmatpush1.msra.mxu0 0.0
    %1805 = vmatprep.subr.mxu0 0.0
    %1806 = vmatpush1.msra.mxu0 0.0
    %1807 = vmatprep.subr.mxu0 0.0
    %1808 = vmatpush1.msra.mxu0 0.0
    %1809 = vmatprep.mubr.f32.mxu0 0.0
    %v1810 = vand.u32 %v1742, 4294901760
    %v1811 = vsub.f32 %v1742, %v1810
    %v1812 = vand.u32 %v1811, 4294901760
    %v1813 = vsub.f32 %v1811, %v1812
    %v1814 = vand.u32 %v1813, 4294901760
    %1815 = vmatmul.mubr.f32.gmra.mrb[0].mxu0 %v1814
    %v1816 = vpop.f32.mrb[0].mxu0
    %v1817 = vadd.f32 0.0, %v1816
    %v1818 = vpop.f32.mrb[0].mxu0
    %1819 = vdwg.mxu0
    %1820 = vmatprep.subr.mxu0 0.0
    %v1821 = vand.u32 %v566, 4294901760
    %v1822 = vsub.f32 %v566, %v1821
    %v1823 = vand.u32 %v1822, 4294901760
    %v1824 = vsub.f32 %v1822, %v1823
    %v1825 = vand.u32 %v1824, 4294901760
    %1826 = vmatpush1.msra.mxu0 %v1825
    %1827 = vmatprep.subr.mxu0 0.0
    %1828 = vmatpush1.msra.mxu0 0.0
    %1829 = vmatprep.subr.mxu0 0.0
    %1830 = vmatpush1.msra.mxu0 0.0
    %1831 = vmatprep.subr.mxu0 0.0
    %1832 = vmatpush1.msra.mxu0 0.0
    %1833 = vmatprep.subr.mxu0 0.0
    %1834 = vmatpush1.msra.mxu0 0.0
    %1835 = vmatprep.subr.mxu0 0.0
    %1836 = vmatpush1.msra.mxu0 0.0
    %1837 = vmatprep.subr.mxu0 0.0
    %1838 = vmatpush1.msra.mxu0 0.0
    %1839 = vmatprep.subr.mxu0 0.0
    %1840 = vmatpush1.msra.mxu0 0.0
    %1841 = vmatprep.subr.mxu0 0.0
    %1842 = vmatpush1.msra.mxu0 0.0
    %1843 = vmatprep.subr.mxu0 0.0
    %1844 = vmatpush1.msra.mxu0 0.0
    %1845 = vmatprep.subr.mxu0 0.0
    %1846 = vmatpush1.msra.mxu0 0.0
    %1847 = vmatprep.subr.mxu0 0.0
    %1848 = vmatpush1.msra.mxu0 0.0
    %1849 = vmatprep.subr.mxu0 0.0
    %1850 = vmatpush1.msra.mxu0 0.0
    %1851 = vmatprep.subr.mxu0 0.0
    %1852 = vmatpush1.msra.mxu0 0.0
    %1853 = vmatprep.subr.mxu0 0.0
    %1854 = vmatpush1.msra.mxu0 0.0
    %1855 = vmatprep.subr.mxu0 0.0
    %1856 = vmatpush1.msra.mxu0 0.0
    %1857 = vmatprep.subr.mxu0 0.0
    %1858 = vmatpush1.msra.mxu0 0.0
    %1859 = vmatprep.subr.mxu0 0.0
    %1860 = vmatpush1.msra.mxu0 0.0
    %1861 = vmatprep.subr.mxu0 0.0
    %1862 = vmatpush1.msra.mxu0 0.0
    %1863 = vmatprep.subr.mxu0 0.0
    %1864 = vmatpush1.msra.mxu0 0.0
    %1865 = vmatprep.subr.mxu0 0.0
    %1866 = vmatpush1.msra.mxu0 0.0
    %1867 = vmatprep.subr.mxu0 0.0
    %1868 = vmatpush1.msra.mxu0 0.0
    %1869 = vmatprep.subr.mxu0 0.0
    %1870 = vmatpush1.msra.mxu0 0.0
    %1871 = vmatprep.subr.mxu0 0.0
    %1872 = vmatpush1.msra.mxu0 0.0
    %1873 = vmatprep.subr.mxu0 0.0
    %1874 = vmatpush1.msra.mxu0 0.0
    %1875 = vmatprep.subr.mxu0 0.0
    %1876 = vmatpush1.msra.mxu0 0.0
    %1877 = vmatprep.subr.mxu0 0.0
    %1878 = vmatpush1.msra.mxu0 0.0
    %1879 = vmatprep.subr.mxu0 0.0
    %1880 = vmatpush1.msra.mxu0 0.0
    %1881 = vmatprep.subr.mxu0 0.0
    %1882 = vmatpush1.msra.mxu0 0.0
    %1883 = vmatprep.subr.mxu0 0.0
    %1884 = vmatpush1.msra.mxu0 0.0
    %1885 = vmatprep.subr.mxu0 0.0
    %1886 = vmatpush1.msra.mxu0 0.0
    %1887 = vmatprep.subr.mxu0 0.0
    %1888 = vmatpush1.msra.mxu0 0.0
    %1889 = vmatprep.mubr.f32.mxu0 0.0
    %v1890 = vand.u32 %v1742, 4294901760
    %1891 = vmatmul.mubr.f32.gmra.mrb[0].mxu0 %v1890
    %v1892 = vpop.f32.mrb[0].mxu0
    %v1893 = vadd.f32 %v1817, %v1892
    %v1894 = vpop.f32.mrb[0].mxu0
    %1895 = vdwg.mxu0
    %1896 = vmatprep.subr.mxu0 0.0
    %v1897 = vand.u32 %v566, 4294901760
    %v1898 = vsub.f32 %v566, %v1897
    %1899 = vmatpush1.msra.mxu0 %v1898
    %1900 = vmatprep.subr.mxu0 0.0
    %1901 = vmatpush1.msra.mxu0 0.0
    %1902 = vmatprep.subr.mxu0 0.0
    %1903 = vmatpush1.msra.mxu0 0.0
    %1904 = vmatprep.subr.mxu0 0.0
    %1905 = vmatpush1.msra.mxu0 0.0
    %1906 = vmatprep.subr.mxu0 0.0
    %1907 = vmatpush1.msra.mxu0 0.0
    %1908 = vmatprep.subr.mxu0 0.0
    %1909 = vmatpush1.msra.mxu0 0.0
    %1910 = vmatprep.subr.mxu0 0.0
    %1911 = vmatpush1.msra.mxu0 0.0
    %1912 = vmatprep.subr.mxu0 0.0
    %1913 = vmatpush1.msra.mxu0 0.0
    %1914 = vmatprep.subr.mxu0 0.0
    %1915 = vmatpush1.msra.mxu0 0.0
    %1916 = vmatprep.subr.mxu0 0.0
    %1917 = vmatpush1.msra.mxu0 0.0
    %1918 = vmatprep.subr.mxu0 0.0
    %1919 = vmatpush1.msra.mxu0 0.0
    %1920 = vmatprep.subr.mxu0 0.0
    %1921 = vmatpush1.msra.mxu0 0.0
    %1922 = vmatprep.subr.mxu0 0.0
    %1923 = vmatpush1.msra.mxu0 0.0
    %1924 = vmatprep.subr.mxu0 0.0
    %1925 = vmatpush1.msra.mxu0 0.0
    %1926 = vmatprep.subr.mxu0 0.0
    %1927 = vmatpush1.msra.mxu0 0.0
    %1928 = vmatprep.subr.mxu0 0.0
    %1929 = vmatpush1.msra.mxu0 0.0
    %1930 = vmatprep.subr.mxu0 0.0
    %1931 = vmatpush1.msra.mxu0 0.0
    %1932 = vmatprep.subr.mxu0 0.0
    %1933 = vmatpush1.msra.mxu0 0.0
    %1934 = vmatprep.subr.mxu0 0.0
    %1935 = vmatpush1.msra.mxu0 0.0
    %1936 = vmatprep.subr.mxu0 0.0
    %1937 = vmatpush1.msra.mxu0 0.0
    %1938 = vmatprep.subr.mxu0 0.0
    %1939 = vmatpush1.msra.mxu0 0.0
    %1940 = vmatprep.subr.mxu0 0.0
    %1941 = vmatpush1.msra.mxu0 0.0
    %1942 = vmatprep.subr.mxu0 0.0
    %1943 = vmatpush1.msra.mxu0 0.0
    %1944 = vmatprep.subr.mxu0 0.0
    %1945 = vmatpush1.msra.mxu0 0.0
    %1946 = vmatprep.subr.mxu0 0.0
    %1947 = vmatpush1.msra.mxu0 0.0
    %1948 = vmatprep.subr.mxu0 0.0
    %1949 = vmatpush1.msra.mxu0 0.0
    %1950 = vmatprep.subr.mxu0 0.0
    %1951 = vmatpush1.msra.mxu0 0.0
    %1952 = vmatprep.subr.mxu0 0.0
    %1953 = vmatpush1.msra.mxu0 0.0
    %1954 = vmatprep.subr.mxu0 0.0
    %1955 = vmatpush1.msra.mxu0 0.0
    %1956 = vmatprep.subr.mxu0 0.0
    %1957 = vmatpush1.msra.mxu0 0.0
    %1958 = vmatprep.subr.mxu0 0.0
    %1959 = vmatpush1.msra.mxu0 0.0
    %1960 = vmatprep.subr.mxu0 0.0
    %1961 = vmatpush1.msra.mxu0 0.0
    %1962 = vmatprep.mubr.f32.mxu0 0.0
    %v1963 = vand.u32 %v1742, 4294901760
    %v1964 = vsub.f32 %v1742, %v1963
    %1965 = vmatmul.mubr.f32.gmra.mrb[0].mxu0 %v1964
    %v1966 = vpop.f32.mrb[0].mxu0
    %v1967 = vadd.f32 %v1893, %v1966
    %v1968 = vpop.f32.mrb[0].mxu0
    %1969 = vdwg.mxu0
    %1970 = vmatprep.subr.mxu0 0.0
    %v1971 = vand.u32 %v566, 4294901760
    %1972 = vmatpush1.msra.mxu0 %v1971
    %1973 = vmatprep.subr.mxu0 0.0
    %1974 = vmatpush1.msra.mxu0 0.0
    %1975 = vmatprep.subr.mxu0 0.0
    %1976 = vmatpush1.msra.mxu0 0.0
    %1977 = vmatprep.subr.mxu0 0.0
    %1978 = vmatpush1.msra.mxu0 0.0
    %1979 = vmatprep.subr.mxu0 0.0
    %1980 = vmatpush1.msra.mxu0 0.0
    %1981 = vmatprep.subr.mxu0 0.0
    %1982 = vmatpush1.msra.mxu0 0.0
    %1983 = vmatprep.subr.mxu0 0.0
    %1984 = vmatpush1.msra.mxu0 0.0
    %1985 = vmatprep.subr.mxu0 0.0
    %1986 = vmatpush1.msra.mxu0 0.0
    %1987 = vmatprep.subr.mxu0 0.0
    %1988 = vmatpush1.msra.mxu0 0.0
    %1989 = vmatprep.subr.mxu0 0.0
    %1990 = vmatpush1.msra.mxu0 0.0
    %1991 = vmatprep.subr.mxu0 0.0
    %1992 = vmatpush1.msra.mxu0 0.0
    %1993 = vmatprep.subr.mxu0 0.0
    %1994 = vmatpush1.msra.mxu0 0.0
    %1995 = vmatprep.subr.mxu0 0.0
    %1996 = vmatpush1.msra.mxu0 0.0
    %1997 = vmatprep.subr.mxu0 0.0
    %1998 = vmatpush1.msra.mxu0 0.0
    %1999 = vmatprep.subr.mxu0 0.0
    %2000 = vmatpush1.msra.mxu0 0.0
    %2001 = vmatprep.subr.mxu0 0.0
    %2002 = vmatpush1.msra.mxu0 0.0
    %2003 = vmatprep.subr.mxu0 0.0
    %2004 = vmatpush1.msra.mxu0 0.0
    %2005 = vmatprep.subr.mxu0 0.0
    %2006 = vmatpush1.msra.mxu0 0.0
    %2007 = vmatprep.subr.mxu0 0.0
    %2008 = vmatpush1.msra.mxu0 0.0
    %2009 = vmatprep.subr.mxu0 0.0
    %2010 = vmatpush1.msra.mxu0 0.0
    %2011 = vmatprep.subr.mxu0 0.0
    %2012 = vmatpush1.msra.mxu0 0.0
    %2013 = vmatprep.subr.mxu0 0.0
    %2014 = vmatpush1.msra.mxu0 0.0
    %2015 = vmatprep.subr.mxu0 0.0
    %2016 = vmatpush1.msra.mxu0 0.0
    %2017 = vmatprep.subr.mxu0 0.0
    %2018 = vmatpush1.msra.mxu0 0.0
    %2019 = vmatprep.subr.mxu0 0.0
    %2020 = vmatpush1.msra.mxu0 0.0
    %2021 = vmatprep.subr.mxu0 0.0
    %2022 = vmatpush1.msra.mxu0 0.0
    %2023 = vmatprep.subr.mxu0 0.0
    %2024 = vmatpush1.msra.mxu0 0.0
    %2025 = vmatprep.subr.mxu0 0.0
    %2026 = vmatpush1.msra.mxu0 0.0
    %2027 = vmatprep.subr.mxu0 0.0
    %2028 = vmatpush1.msra.mxu0 0.0
    %2029 = vmatprep.subr.mxu0 0.0
    %2030 = vmatpush1.msra.mxu0 0.0
    %2031 = vmatprep.subr.mxu0 0.0
    %2032 = vmatpush1.msra.mxu0 0.0
    %2033 = vmatprep.subr.mxu0 0.0
    %2034 = vmatpush1.msra.mxu0 0.0
    %2035 = vmatprep.mubr.f32.mxu0 0.0
    %v2036 = vand.u32 %v1742, 4294901760
    %v2037 = vsub.f32 %v1742, %v2036
    %v2038 = vand.u32 %v2037, 4294901760
    %2039 = vmatmul.mubr.f32.gmra.mrb[0].mxu0 %v2038
    %v2040 = vpop.f32.mrb[0].mxu0
    %v2041 = vadd.f32 %v1967, %v2040
    %v2042 = vpop.f32.mrb[0].mxu0
    %2043 = vdwg.mxu0
    %2044 = vmatprep.subr.mxu0 0.0
    %v2045 = vand.u32 %v566, 4294901760
    %v2046 = vsub.f32 %v566, %v2045
    %v2047 = vand.u32 %v2046, 4294901760
    %2048 = vmatpush1.msra.mxu0 %v2047
    %2049 = vmatprep.subr.mxu0 0.0
    %2050 = vmatpush1.msra.mxu0 0.0
    %2051 = vmatprep.subr.mxu0 0.0
    %2052 = vmatpush1.msra.mxu0 0.0
    %2053 = vmatprep.subr.mxu0 0.0
    %2054 = vmatpush1.msra.mxu0 0.0
    %2055 = vmatprep.subr.mxu0 0.0
    %2056 = vmatpush1.msra.mxu0 0.0
    %2057 = vmatprep.subr.mxu0 0.0
    %2058 = vmatpush1.msra.mxu0 0.0
    %2059 = vmatprep.subr.mxu0 0.0
    %2060 = vmatpush1.msra.mxu0 0.0
    %2061 = vmatprep.subr.mxu0 0.0
    %2062 = vmatpush1.msra.mxu0 0.0
    %2063 = vmatprep.subr.mxu0 0.0
    %2064 = vmatpush1.msra.mxu0 0.0
    %2065 = vmatprep.subr.mxu0 0.0
    %2066 = vmatpush1.msra.mxu0 0.0
    %2067 = vmatprep.subr.mxu0 0.0
    %2068 = vmatpush1.msra.mxu0 0.0
    %2069 = vmatprep.subr.mxu0 0.0
    %2070 = vmatpush1.msra.mxu0 0.0
    %2071 = vmatprep.subr.mxu0 0.0
    %2072 = vmatpush1.msra.mxu0 0.0
    %2073 = vmatprep.subr.mxu0 0.0
    %2074 = vmatpush1.msra.mxu0 0.0
    %2075 = vmatprep.subr.mxu0 0.0
    %2076 = vmatpush1.msra.mxu0 0.0
    %2077 = vmatprep.subr.mxu0 0.0
    %2078 = vmatpush1.msra.mxu0 0.0
    %2079 = vmatprep.subr.mxu0 0.0
    %2080 = vmatpush1.msra.mxu0 0.0
    %2081 = vmatprep.subr.mxu0 0.0
    %2082 = vmatpush1.msra.mxu0 0.0
    %2083 = vmatprep.subr.mxu0 0.0
    %2084 = vmatpush1.msra.mxu0 0.0
    %2085 = vmatprep.subr.mxu0 0.0
    %2086 = vmatpush1.msra.mxu0 0.0
    %2087 = vmatprep.subr.mxu0 0.0
    %2088 = vmatpush1.msra.mxu0 0.0
    %2089 = vmatprep.subr.mxu0 0.0
    %2090 = vmatpush1.msra.mxu0 0.0
    %2091 = vmatprep.subr.mxu0 0.0
    %2092 = vmatpush1.msra.mxu0 0.0
    %2093 = vmatprep.subr.mxu0 0.0
    %2094 = vmatpush1.msra.mxu0 0.0
    %2095 = vmatprep.subr.mxu0 0.0
    %2096 = vmatpush1.msra.mxu0 0.0
    %2097 = vmatprep.subr.mxu0 0.0
    %2098 = vmatpush1.msra.mxu0 0.0
    %2099 = vmatprep.subr.mxu0 0.0
    %2100 = vmatpush1.msra.mxu0 0.0
    %2101 = vmatprep.subr.mxu0 0.0
    %2102 = vmatpush1.msra.mxu0 0.0
    %2103 = vmatprep.subr.mxu0 0.0
    %2104 = vmatpush1.msra.mxu0 0.0
    %2105 = vmatprep.subr.mxu0 0.0
    %2106 = vmatpush1.msra.mxu0 0.0
    %2107 = vmatprep.subr.mxu0 0.0
    %2108 = vmatpush1.msra.mxu0 0.0
    %2109 = vmatprep.subr.mxu0 0.0
    %2110 = vmatpush1.msra.mxu0 0.0
    %2111 = vmatprep.mubr.f32.mxu0 0.0
    %v2112 = vand.u32 %v1742, 4294901760
    %2113 = vmatmul.mubr.f32.gmra.mrb[0].mxu0 %v2112
    %v2114 = vpop.f32.mrb[0].mxu0
    %v2115 = vadd.f32 %v2041, %v2114
    %v2116 = vpop.f32.mrb[0].mxu0
    %2117 = vdwg.mxu0
    %2118 = vmatprep.subr.mxu0 0.0
    %v2119 = vand.u32 %v566, 4294901760
    %2120 = vmatpush1.msra.mxu0 %v2119
    %2121 = vmatprep.subr.mxu0 0.0
    %2122 = vmatpush1.msra.mxu0 0.0
    %2123 = vmatprep.subr.mxu0 0.0
    %2124 = vmatpush1.msra.mxu0 0.0
    %2125 = vmatprep.subr.mxu0 0.0
    %2126 = vmatpush1.msra.mxu0 0.0
    %2127 = vmatprep.subr.mxu0 0.0
    %2128 = vmatpush1.msra.mxu0 0.0
    %2129 = vmatprep.subr.mxu0 0.0
    %2130 = vmatpush1.msra.mxu0 0.0
    %2131 = vmatprep.subr.mxu0 0.0
    %2132 = vmatpush1.msra.mxu0 0.0
    %2133 = vmatprep.subr.mxu0 0.0
    %2134 = vmatpush1.msra.mxu0 0.0
    %2135 = vmatprep.subr.mxu0 0.0
    %2136 = vmatpush1.msra.mxu0 0.0
    %2137 = vmatprep.subr.mxu0 0.0
    %2138 = vmatpush1.msra.mxu0 0.0
    %2139 = vmatprep.subr.mxu0 0.0
    %2140 = vmatpush1.msra.mxu0 0.0
    %2141 = vmatprep.subr.mxu0 0.0
    %2142 = vmatpush1.msra.mxu0 0.0
    %2143 = vmatprep.subr.mxu0 0.0
    %2144 = vmatpush1.msra.mxu0 0.0
    %2145 = vmatprep.subr.mxu0 0.0
    %2146 = vmatpush1.msra.mxu0 0.0
    %2147 = vmatprep.subr.mxu0 0.0
    %2148 = vmatpush1.msra.mxu0 0.0
    %2149 = vmatprep.subr.mxu0 0.0
    %2150 = vmatpush1.msra.mxu0 0.0
    %2151 = vmatprep.subr.mxu0 0.0
    %2152 = vmatpush1.msra.mxu0 0.0
    %2153 = vmatprep.subr.mxu0 0.0
    %2154 = vmatpush1.msra.mxu0 0.0
    %2155 = vmatprep.subr.mxu0 0.0
    %2156 = vmatpush1.msra.mxu0 0.0
    %2157 = vmatprep.subr.mxu0 0.0
    %2158 = vmatpush1.msra.mxu0 0.0
    %2159 = vmatprep.subr.mxu0 0.0
    %2160 = vmatpush1.msra.mxu0 0.0
    %2161 = vmatprep.subr.mxu0 0.0
    %2162 = vmatpush1.msra.mxu0 0.0
    %2163 = vmatprep.subr.mxu0 0.0
    %2164 = vmatpush1.msra.mxu0 0.0
    %2165 = vmatprep.subr.mxu0 0.0
    %2166 = vmatpush1.msra.mxu0 0.0
    %2167 = vmatprep.subr.mxu0 0.0
    %2168 = vmatpush1.msra.mxu0 0.0
    %2169 = vmatprep.subr.mxu0 0.0
    %2170 = vmatpush1.msra.mxu0 0.0
    %2171 = vmatprep.subr.mxu0 0.0
    %2172 = vmatpush1.msra.mxu0 0.0
    %2173 = vmatprep.subr.mxu0 0.0
    %2174 = vmatpush1.msra.mxu0 0.0
    %2175 = vmatprep.subr.mxu0 0.0
    %2176 = vmatpush1.msra.mxu0 0.0
    %2177 = vmatprep.subr.mxu0 0.0
    %2178 = vmatpush1.msra.mxu0 0.0
    %2179 = vmatprep.subr.mxu0 0.0
    %2180 = vmatpush1.msra.mxu0 0.0
    %2181 = vmatprep.subr.mxu0 0.0
    %2182 = vmatpush1.msra.mxu0 0.0
    %2183 = vmatprep.mubr.f32.mxu0 0.0
    %v2184 = vand.u32 %v1742, 4294901760
    %2185 = vmatmul.mubr.f32.gmra.mrb[0].mxu0 %v2184
    %v2186 = vpop.f32.mrb[0].mxu0
    %v2187 = vadd.f32 %v2115, %v2186
    %v2188 = vpop.f32.mrb[0].mxu0
    %2189 = vdwg.mxu0
    %v2190 = vmul.f32 %v1706, %v33
    %v2191 = vmul.f32 %v2187, %v33
    %vm2192 = vcmask 257024
    %v2193 = vsel %vm2192, %v2190, 0.0
    %v2194 = vrot.slane %v2193, 4
    %v2195 = vadd.f32 %v2193, %v2194
    %v2196 = vrot.slane %v2195, 2
    %v2197 = vadd.f32 %v2195, %v2196
    %v2198 = vrot.slane %v2197, 1
    %v2199 = vadd.f32 %v2197, %v2198
    %v2200 = vsel %vm2192, %v2191, 0.0
    %v2201 = vrot.slane %v2200, 4
    %v2202 = vadd.f32 %v2200, %v2201
    %v2203 = vrot.slane %v2202, 2
    %v2204 = vadd.f32 %v2202, %v2203
    %v2205 = vrot.slane %v2204, 1
    %v2206 = vadd.f32 %v2204, %v2205
    %vm2207 = vcmp.gt.f32.partialorder %v2199, 0.0
    %vm2208 = vcmp.gt.f32.partialorder %v2206, 0.0
    %v2209 = vmin.f32 %v2199, 0.0
    %v2210 = vmin.f32 %v2206, 0.0
    %v2211 = vmul.f32 %v2209, 1.442695
    %v2212 = vpow.pop %v2211
    %v2213 = vmul.f32 %v2210, 1.442695
    %v2214 = vpow.pop %v2213
    %v2215 = vsub.f32 %v2212, 1.0
    %v2216 = vsub.f32 %v2214, 1.0
    %v2217 = vsel %vm2207, %v2199, %v2215
    %v2218 = vsel %vm2208, %v2206, %v2216
    %vm2221 = vcmask 1041409
    %v2222 = vsel %vm2221, %v2218, %v2217
    %vm2224 = vcmask 254976
    %2225 = vst.msk [vmem:[#allocation2] sm:$0x3] %vm2224, %v2222
    // Predicated region
    $region22: #{tpu_custom_call.1} parent=1 // pred_check
      _
    $region23: #{tpu_custom_call.1} parent=1 // pred_check_branch
      %2227 = sbr.rel (0) target = $region25
    $region24: #{tpu_custom_call.1} parent=1 // pred_region
      %s2229 = ssub.s32 32, 32
      %2230 = vsyncadd [#allocation3], %s2229
      %s2232 = sshll.u32 [#allocation2], 4
      %s2233 = int_to_ptr.vmem [resolvable:$true] %s2232
      %2235 = dma.vmem_to_hbm [thread:$0]  %s2233, 32, %s5, [#allocation3]
    $region25: #{tpu_custom_call.1} parent=1 // pred_fallthru
      _
    // Predicated region
    $region26: #{tpu_custom_call.1} parent=1 // pred_check
      _
    $region27: #{tpu_custom_call.1} parent=1 // pred_check_branch
      %2237 = sbr.rel (0) target = $region29
    $region28: #{tpu_custom_call.1} parent=1 // pred_region
      %2238 = dma.done [#allocation3], 32
    $region29: #{tpu_custom_call.1} parent=1 // pred_fallthru
      _
    %2239 = vsyncpa [#allocation3], 1

</llo_original>
